<compile_context>
chip_gen: v7x
topology: tpu7x:2x2x1
jax: 0.10.0
libtpu: 0.0.40
codegen_flags: <defaults>
</compile_context>

<pallas_src>
import functools

import jax
import jax.numpy as jnp
from jax.experimental import pallas as pl
from jax.experimental.pallas import tpu as pltpu


def _round_up(x, m):
    return (x + m - 1) // m * m


def _pad2d(x, rows, cols, dtype):
    """Zero-pad a 2-D array to (rows, cols) and cast; no-op if already there."""
    if x.shape == (rows, cols) and x.dtype == dtype:
        return x
    out = jnp.zeros((rows, cols), dtype)
    return out.at[:x.shape[0], :x.shape[1]].set(x.astype(dtype))


# --------------------------------------------------------------------------
# Kernel
# --------------------------------------------------------------------------
def _lav_fusion_kernel(text_ref, img_ref,
                       wl_ref, bl_ref,
                       wv_ref, bv_ref,
                       wfl_ref, wfv_ref, bf_ref,
                       wfc_ref, bfc_ref,
                       pred_ref,
                       acc_ref,
                       *, num_classes):
    k = pl.program_id(1)
    nk = pl.num_programs(1)

    # ---- init the vision accumulator at the first K tile ----
    @pl.when(k == 0)
    def _():
        acc_ref[...] = jnp.zeros_like(acc_ref)

    # ---- stream the vision weight: accumulate img_tile @ wv_tile ----
    acc_ref[...] += jnp.dot(img_ref[...], wv_ref[...],
                            preferred_element_type=jnp.float32)

    # ---- epilogue (language branch, fusion, fc, softmax) on the last K tile ----
    @pl.when(k == nk - 1)
    def _():
        # language_module(text) -> ReLU  (tiny matmul, once per batch tile)
        t = jnp.dot(text_ref[...], wl_ref[...],
                    preferred_element_type=jnp.float32) + bl_ref[...]
        t = jnp.maximum(t, 0.0)

        # vision_module(image) -> ReLU  (accumulated over K tiles)
        v = jnp.maximum(acc_ref[...] + bv_ref[...], 0.0)

        # fusion Linear on concat([t, v], dim=1), without the concat copy:
        # cat @ W_fuse == t @ W_fuse[:Dl] + v @ W_fuse[Dl:]
        fused = (jnp.dot(t.astype(wfl_ref.dtype), wfl_ref[...],
                         preferred_element_type=jnp.float32)
                 + jnp.dot(v.astype(wfv_ref.dtype), wfv_ref[...],
                           preferred_element_type=jnp.float32)
                 + bf_ref[...])
        fused = jnp.maximum(fused, 0.0)

        # TODO(synk): training-mode dropout (pltpu.prng_* mask + 1/(1-p) scale);
        # eval-mode dropout is identity.

        # fc -> logits (class dim padded to 128 lanes for a lane-dense store)
        logits = jnp.dot(fused.astype(wfc_ref.dtype), wfc_ref[...],
                         preferred_element_type=jnp.float32) + bfc_ref[...]

        # mask padded class lanes before softmax
        col = jax.lax.broadcasted_iota(jnp.int32, logits.shape, 1)
        logits = jnp.where(col < num_classes, logits, jnp.float32(-1e30))

        # numerically-stable softmax over classes (torch F.softmax dim=1)
        m = jnp.max(logits, axis=-1, keepdims=True)
        e = jnp.exp(logits - m)
        denom = jnp.sum(e, axis=-1, keepdims=True)
        pred_ref[...] = (e * pl.reciprocal(denom, approx=True)).astype(pred_ref.dtype)


# --------------------------------------------------------------------------
# One-time parameter preparation (cast + pad, NOT in the per-call path)
# --------------------------------------------------------------------------
def prepare_params(raw):
    T_in, Dl = raw["w_lang"].shape
    K, Dv = raw["w_vis"].shape
    F = raw["w_fuse"].shape[1]
    C = raw["w_fc"].shape[1]

    Dl_p = _round_up(Dl, 128)
    Dv_p = _round_up(Dv, 128)
    F_p = _round_up(F, 128)
    C_p = _round_up(C, 128)
    K_p = _round_up(K, 128)

    w_fuse = raw["w_fuse"]
    prepped = {
        "w_lang":   _pad2d(raw["w_lang"], T_in, Dl_p, jnp.bfloat16),
        "b_lang":   _pad2d(raw["b_lang"], 1, Dl_p, jnp.float32),
        "w_vis":    _pad2d(raw["w_vis"], K_p, Dv_p, jnp.bfloat16),
        "b_vis":    _pad2d(raw["b_vis"], 1, Dv_p, jnp.float32),
        "w_fuse_l": _pad2d(w_fuse[:Dl], Dl_p, F_p, jnp.bfloat16),
        "w_fuse_v": _pad2d(w_fuse[Dl:], Dv_p, F_p, jnp.bfloat16),
        "b_fuse":   _pad2d(raw["b_fuse"], 1, F_p, jnp.float32),
        "w_fc":     _pad2d(raw["w_fc"], F_p, C_p, jnp.bfloat16),
        "b_fc":     _pad2d(raw["b_fc"], 1, C_p, jnp.float32),
    }
    meta = dict(T_in=T_in, Dl=Dl, Dv=Dv, F=F, num_classes=C, K=K,
                Dl_p=Dl_p, Dv_p=Dv_p, F_p=F_p, C_p=C_p, K_p=K_p)
    return prepped, meta


# --------------------------------------------------------------------------
# Forward wrapper
# --------------------------------------------------------------------------
def language_and_vision_concat(text, image, prepped, meta, *,
                               tm_cap=256, tk_cap=2048,
                               vmem_budget_bytes=40 * 1024 * 1024):
    """text: [B, T_in] f32, image: [B, C, H, W] f32 (NCHW, flattened inside)."""
    B = text.shape[0]
    T_in, K, K_p = meta["T_in"], meta["K"], meta["K_p"]
    Dl_p, Dv_p, F_p, C_p = meta["Dl_p"], meta["Dv_p"], meta["F_p"], meta["C_p"]
    num_classes = meta["num_classes"]

    # ---- batch tiling: minimize #batch tiles (each re-streams w_vis from HBM);
    #      tm up to 256 fills the 256-wide MXU on v6e/v7x ----
    tm = min(_round_up(B, 16), tm_cap)
    B_pad = _round_up(B, tm)
    nb = B_pad // tm

    # ---- K tiling for the streamed vision weight, from an explicit VMEM
    #      budget (conservative for v7x's 64 MiB) ----
    bf2, f4 = 2, 4
    resident = ((T_in * Dl_p + Dl_p * F_p + Dv_p * F_p + F_p * C_p) * bf2
                + (Dl_p + Dv_p + F_p + C_p) * f4)
    fixed = (resident
             + tm * Dv_p * f4            # f32 accumulator scratch
             + 2 * tm * C_p * f4         # double-buffered output slab
             + 2 * tm * T_in * bf2)      # double-buffered text block
    per_tk = 2 * (tm + Dv_p) * bf2       # double-buffered img + w_vis tiles
    tk_budget = max(128, (vmem_budget_bytes - fixed) // per_tk)
    tk_budget = min(tk_budget, tk_cap, K_p)
    tk_budget = (tk_budget // 128) * 128
    tk = 128
    for cand in range(tk_budget, 127, -128):
        if K_p % cand == 0:              # divisor of K_pad -> no extra padding
            tk = cand
            break
    nk = K_p // tk

    need = fixed + per_tk * tk
    vmem_limit = int(min(max(32 * 1024 * 1024, need + 8 * 1024 * 1024),
                         50 * 1024 * 1024))

    # ---- per-call activation prep only (weights were prepped offline) ----
    text_p = _pad2d(text, B_pad, T_in, jnp.bfloat16)
    img_flat = image.reshape(B, -1)
    img_p = _pad2d(img_flat, B_pad, K_p, jnp.bfloat16)

    kernel = functools.partial(_lav_fusion_kernel, num_classes=num_classes)

    flops = 2 * B_pad * (T_in * Dl_p + K_p * Dv_p + Dl_p * F_p
                         + Dv_p * F_p + F_p * C_p)
    bytes_accessed = (text_p.size * bf2 + img_p.size * bf2
                      + nb * prepped["w_vis"].size * bf2   # re-streamed per batch tile
                      + nb * resident
                      + B_pad * C_p * f4)
    cost = pl.CostEstimate(flops=int(flops),
                           transcendentals=int(B_pad * C_p),
                           bytes_accessed=int(bytes_accessed))

    def _build_specs(single_buffer_resident):
        def res(shape):
            if single_buffer_resident:
                return pl.BlockSpec(shape, lambda i, k: (0, 0),
                                    pipeline_mode=pl.Buffered(1))
            return pl.BlockSpec(shape, lambda i, k: (0, 0))
        return [
            pl.BlockSpec((tm, T_in), lambda i, k: (i, 0)),   # text (per batch tile)
            pl.BlockSpec((tm, tk), lambda i, k: (i, k)),     # image (streamed over K)
            res((T_in, Dl_p)),                               # w_lang (resident)
            res((1, Dl_p)),                                  # b_lang
            pl.BlockSpec((tk, Dv_p), lambda i, k: (k, 0)),   # w_vis (streamed over K)
            res((1, Dv_p)),                                  # b_vis
            res((Dl_p, F_p)),                                # w_fuse (language half)
            res((Dv_p, F_p)),                                # w_fuse (vision half)
            res((1, F_p)),                                   # b_fuse
            res((F_p, C_p)),                                 # w_fc (resident)
            res((1, C_p)),                                   # b_fc
        ]

    def _run(single_buffer_resident):
        grid_spec = pltpu.PrefetchScalarGridSpec(
            num_scalar_prefetch=0,
            grid=(nb, nk),
            in_specs=_build_specs(single_buffer_resident),
            out_specs=pl.BlockSpec((tm, C_p), lambda i, k: (i, 0)),
            scratch_shapes=[pltpu.VMEM((tm, Dv_p), jnp.float32)],
        )
        return pl.pallas_call(
            kernel,
            out_shape=jax.ShapeDtypeStruct((B_pad, C_p), jnp.float32),
            grid_spec=grid_spec,
            compiler_params=pltpu.CompilerParams(
                dimension_semantics=("parallel", "arbitrary"),
                vmem_limit_bytes=vmem_limit),
            cost_estimate=cost,
        )(text_p, img_p,
          prepped["w_lang"], prepped["b_lang"],
          prepped["w_vis"], prepped["b_vis"],
          prepped["w_fuse_l"], prepped["w_fuse_v"], prepped["b_fuse"],
          prepped["w_fc"], prepped["b_fc"])

    if hasattr(pl, "Buffered"):
        try:
            pred_pad = _run(True)
        except Exception:
            pred_pad = _run(False)   # fallback: default double-buffered residents
    else:
        pred_pad = _run(False)

    return pred_pad[:B, :num_classes]


# --------------------------------------------------------------------------
# Pure-JAX f32 reference + parameter construction
# --------------------------------------------------------------------------
def _reference(text, image, params):
    B = text.shape[0]
    img = image.reshape(B, -1)
    t = jax.nn.relu(text @ params["w_lang"] + params["b_lang"])
    v = jax.nn.relu(img @ params["w_vis"] + params["b_vis"])
    cat = jnp.concatenate([t, v], axis=-1)
    fused = jax.nn.relu(cat @ params["w_fuse"] + params["b_fuse"])
    logits = fused @ params["w_fc"] + params["b_fc"]
    return jax.nn.softmax(logits, axis=-1)


def make_params(key, *, text_in, img_in, language_feature_dim,
                vision_feature_dim, fusion_output_size, num_classes):
    ks = jax.random.split(key, 4)
    scale = 0.05
    return {
        "w_lang": scale * jax.random.normal(ks[0], (text_in, language_feature_dim), jnp.float32),
        "b_lang": jnp.zeros((1, language_feature_dim), jnp.float32),
        "w_vis": scale * jax.random.normal(ks[1], (img_in, vision_feature_dim), jnp.float32),
        "b_vis": jnp.zeros((1, vision_feature_dim), jnp.float32),
        "w_fuse": scale * jax.random.normal(
            ks[2], (language_feature_dim + vision_feature_dim, fusion_output_size),
            jnp.float32),
        "b_fuse": 0.01 * jnp.ones((1, fusion_output_size), jnp.float32),
        "w_fc": scale * jax.random.normal(ks[3], (fusion_output_size, num_classes), jnp.float32),
        "b_fc": jnp.zeros((1, num_classes), jnp.float32),
    }


if __name__ == "__main__":
    B, C, H, W = 2, 4, 16, 16
    TEXT_IN = 8
    LANG_DIM, VIS_DIM = 32, 32
    FUSION = 64
    NUM_CLASSES = 2

    key = jax.random.PRNGKey(0)
    k_text, k_img, k_param = jax.random.split(key, 3)
    text = jax.random.normal(k_text, (B, TEXT_IN), jnp.float32)
    image = jax.random.normal(k_img, (B, C, H, W), jnp.float32)

    raw_params = make_params(k_param, text_in=TEXT_IN, img_in=C * H * W,
                             language_feature_dim=LANG_DIM,
                             vision_feature_dim=VIS_DIM,
                             fusion_output_size=FUSION,
                             num_classes=NUM_CLASSES)

    # One-time parameter prep (bf16 cast + lane padding) — outside the
    # per-call path, per the performance review.
    prepped, meta = prepare_params(raw_params)
    prepped = jax.tree_util.tree_map(jax.block_until_ready, prepped)

    pred = language_and_vision_concat(text, image, prepped, meta)
    pred = jax.block_until_ready(pred)

    # label=None -> loss is None (matches the PyTorch forward)
    loss = None

    # sanity: shape, softmax rows ~1, close to the f32 reference (bf16 weights)
    assert pred.shape == (B, NUM_CLASSES)
    assert bool(jnp.all(jnp.abs(jnp.sum(pred, axis=-1) - 1.0) < 1e-2))
    ref = _reference(text, image, raw_params)
    assert bool(jnp.allclose(pred, ref, atol=5e-2)), (pred, ref)
    print("KERNEL_OK")
</pallas_src>

<mosaic_0001>
module attributes {stable_mosaic.version = 11 : i64} {
  func.func @_lav_fusion_kernel(%arg0: i32, %arg1: i32, %arg2: memref<16x8xbf16, #tpu.memory_space<vmem>>, %arg3: memref<16x1024xbf16, #tpu.memory_space<vmem>>, %arg4: memref<8x128xbf16, #tpu.memory_space<vmem>>, %arg5: memref<1x128xf32, #tpu.memory_space<vmem>>, %arg6: memref<1024x128xbf16, #tpu.memory_space<vmem>>, %arg7: memref<1x128xf32, #tpu.memory_space<vmem>>, %arg8: memref<128x128xbf16, #tpu.memory_space<vmem>>, %arg9: memref<128x128xbf16, #tpu.memory_space<vmem>>, %arg10: memref<1x128xf32, #tpu.memory_space<vmem>>, %arg11: memref<128x128xbf16, #tpu.memory_space<vmem>>, %arg12: memref<1x128xf32, #tpu.memory_space<vmem>>, %arg13: memref<16x128xf32, #tpu.memory_space<vmem>>, %arg14: memref<16x128xf32, #tpu.memory_space<vmem>>) attributes {dimension_semantics = [#tpu.dimension_semantics<parallel>, #tpu.dimension_semantics<arbitrary>], iteration_bounds = array<i64: 1, 1>, scalar_prefetch = 0 : i64, scratch_operands = 1 : i64, tpu.core_type = #tpu.core_type<tc>, window_params = [{transform_indices = @transform_0, window_bounds = array<i64: 16, 8>}, {transform_indices = @transform_1, window_bounds = array<i64: 16, 1024>}, {pipeline_mode = #tpu.pipeline_mode<synchronous>, transform_indices = @transform_2, window_bounds = array<i64: 8, 128>}, {pipeline_mode = #tpu.pipeline_mode<synchronous>, transform_indices = @transform_3, window_bounds = array<i64: 1, 128>}, {transform_indices = @transform_4, window_bounds = array<i64: 1024, 128>}, {pipeline_mode = #tpu.pipeline_mode<synchronous>, transform_indices = @transform_5, window_bounds = array<i64: 1, 128>}, {pipeline_mode = #tpu.pipeline_mode<synchronous>, transform_indices = @transform_6, window_bounds = array<i64: 128, 128>}, {pipeline_mode = #tpu.pipeline_mode<synchronous>, transform_indices = @transform_7, window_bounds = array<i64: 128, 128>}, {pipeline_mode = #tpu.pipeline_mode<synchronous>, transform_indices = @transform_8, window_bounds = array<i64: 1, 128>}, {pipeline_mode = #tpu.pipeline_mode<synchronous>, transform_indices = @transform_9, window_bounds = array<i64: 128, 128>}, {pipeline_mode = #tpu.pipeline_mode<synchronous>, transform_indices = @transform_10, window_bounds = array<i64: 1, 128>}, {transform_indices = @transform_11, window_bounds = array<i64: 16, 128>}]} {
    %c0_i32 = arith.constant 0 : i32
    %0 = arith.cmpi eq, %arg1, %c0_i32 : i32
    %1 = arith.extui %0 : i1 to i32
    %c0_i32_0 = arith.constant 0 : i32
    %2 = arith.cmpi ne, %1, %c0_i32_0 : i32
    scf.if %2 {
      %cst_10 = arith.constant 0.000000e+00 : f32
      %12 = vector.broadcast %cst_10 : f32 to vector<16x128xf32>
      %c0_11 = arith.constant 0 : index
      %c0_12 = arith.constant 0 : index
      %13 = vector.load %arg14[%c0_11, %c0_12] : memref<16x128xf32, #tpu.memory_space<vmem>>, vector<16x128xf32>
      tpu.vector_store %arg14[%c0_11, %c0_12], %12 {strides = array<i32>} : memref<16x128xf32, #tpu.memory_space<vmem>>, vector<16x128xf32>,
    } else {
    }
    %c0 = arith.constant 0 : index
    %c0_1 = arith.constant 0 : index
    %3 = vector.load %arg14[%c0, %c0_1] : memref<16x128xf32, #tpu.memory_space<vmem>>, vector<16x128xf32>
    %c0_2 = arith.constant 0 : index
    %c0_3 = arith.constant 0 : index
    %4 = vector.load %arg3[%c0_2, %c0_3] : memref<16x1024xbf16, #tpu.memory_space<vmem>>, vector<16x1024xbf16>
    %c0_4 = arith.constant 0 : index
    %c0_5 = arith.constant 0 : index
    %5 = vector.load %arg6[%c0_4, %c0_5] : memref<1024x128xbf16, #tpu.memory_space<vmem>>, vector<1024x128xbf16>
    %cst = arith.constant dense<0.000000e+00> : vector<16x128xf32>
    %6 = tpu.matmul %4, %5, %cst {dimension_numbers = #tpu.dot_dimension_numbers<[1], [0], [0], [1], [0, 0, 1, 1], [], []>} : vector<16x1024xbf16>, vector<1024x128xbf16>, vector<16x128xf32> -> vector<16x128xf32>
    %7 = arith.addf %3, %6 : vector<16x128xf32>
    %c0_6 = arith.constant 0 : index
    %c0_7 = arith.constant 0 : index
    %8 = vector.load %arg14[%c0_6, %c0_7] : memref<16x128xf32, #tpu.memory_space<vmem>>, vector<16x128xf32>
    tpu.vector_store %arg14[%c0_6, %c0_7], %7 {strides = array<i32>} : memref<16x128xf32, #tpu.memory_space<vmem>>, vector<16x128xf32>,
    %c0_i32_8 = arith.constant 0 : i32
    %9 = arith.cmpi eq, %arg1, %c0_i32_8 : i32
    %10 = arith.extui %9 : i1 to i32
    %c0_i32_9 = arith.constant 0 : i32
    %11 = arith.cmpi ne, %10, %c0_i32_9 : i32
    scf.if %11 {
      %c0_10 = arith.constant 0 : index
      %c0_11 = arith.constant 0 : index
      %12 = vector.load %arg2[%c0_10, %c0_11] : memref<16x8xbf16, #tpu.memory_space<vmem>>, vector<16x8xbf16>
      %c0_12 = arith.constant 0 : index
      %c0_13 = arith.constant 0 : index
      %13 = vector.load %arg4[%c0_12, %c0_13] : memref<8x128xbf16, #tpu.memory_space<vmem>>, vector<8x128xbf16>
      %cst_14 = arith.constant dense<0.000000e+00> : vector<16x128xf32>
      %14 = tpu.matmul %12, %13, %cst_14 {dimension_numbers = #tpu.dot_dimension_numbers<[1], [0], [0], [1], [0, 0, 1, 1], [], []>} : vector<16x8xbf16>, vector<8x128xbf16>, vector<16x128xf32> -> vector<16x128xf32>
      %c0_15 = arith.constant 0 : index
      %c0_16 = arith.constant 0 : index
      %15 = vector.load %arg5[%c0_15, %c0_16] : memref<1x128xf32, #tpu.memory_space<vmem>>, vector<1x128xf32>
      %16 = vector.broadcast %15 : vector<1x128xf32> to vector<16x128xf32>
      %17 = arith.addf %14, %16 : vector<16x128xf32>
      %cst_17 = arith.constant 0.000000e+00 : f32
      %18 = vector.broadcast %cst_17 : f32 to vector<16x128xf32>
      %19 = arith.maximumf %17, %18 : vector<16x128xf32>
      %c0_18 = arith.constant 0 : index
      %c0_19 = arith.constant 0 : index
      %20 = vector.load %arg14[%c0_18, %c0_19] : memref<16x128xf32, #tpu.memory_space<vmem>>, vector<16x128xf32>
      %c0_20 = arith.constant 0 : index
      %c0_21 = arith.constant 0 : index
      %21 = vector.load %arg7[%c0_20, %c0_21] : memref<1x128xf32, #tpu.memory_space<vmem>>, vector<1x128xf32>
      %22 = vector.broadcast %21 : vector<1x128xf32> to vector<16x128xf32>
      %23 = arith.addf %20, %22 : vector<16x128xf32>
      %cst_22 = arith.constant 0.000000e+00 : f32
      %24 = vector.broadcast %cst_22 : f32 to vector<16x128xf32>
      %25 = arith.maximumf %23, %24 : vector<16x128xf32>
      %26 = arith.truncf %19 : vector<16x128xf32> to vector<16x128xbf16>
      %c0_23 = arith.constant 0 : index
      %c0_24 = arith.constant 0 : index
      %27 = vector.load %arg8[%c0_23, %c0_24] : memref<128x128xbf16, #tpu.memory_space<vmem>>, vector<128x128xbf16>
      %cst_25 = arith.constant dense<0.000000e+00> : vector<16x128xf32>
      %28 = tpu.matmul %26, %27, %cst_25 {dimension_numbers = #tpu.dot_dimension_numbers<[1], [0], [0], [1], [0, 0, 1, 1], [], []>} : vector<16x128xbf16>, vector<128x128xbf16>, vector<16x128xf32> -> vector<16x128xf32>
      %29 = arith.truncf %25 : vector<16x128xf32> to vector<16x128xbf16>
      %c0_26 = arith.constant 0 : index
      %c0_27 = arith.constant 0 : index
      %30 = vector.load %arg9[%c0_26, %c0_27] : memref<128x128xbf16, #tpu.memory_space<vmem>>, vector<128x128xbf16>
      %cst_28 = arith.constant dense<0.000000e+00> : vector<16x128xf32>
      %31 = tpu.matmul %29, %30, %cst_28 {dimension_numbers = #tpu.dot_dimension_numbers<[1], [0], [0], [1], [0, 0, 1, 1], [], []>} : vector<16x128xbf16>, vector<128x128xbf16>, vector<16x128xf32> -> vector<16x128xf32>
      %32 = arith.addf %28, %31 : vector<16x128xf32>
      %c0_29 = arith.constant 0 : index
      %c0_30 = arith.constant 0 : index
      %33 = vector.load %arg10[%c0_29, %c0_30] : memref<1x128xf32, #tpu.memory_space<vmem>>, vector<1x128xf32>
      %34 = vector.broadcast %33 : vector<1x128xf32> to vector<16x128xf32>
      %35 = arith.addf %32, %34 : vector<16x128xf32>
      %cst_31 = arith.constant 0.000000e+00 : f32
      %36 = vector.broadcast %cst_31 : f32 to vector<16x128xf32>
      %37 = arith.maximumf %35, %36 : vector<16x128xf32>
      %38 = arith.truncf %37 : vector<16x128xf32> to vector<16x128xbf16>
      %c0_32 = arith.constant 0 : index
      %c0_33 = arith.constant 0 : index
      %39 = vector.load %arg11[%c0_32, %c0_33] : memref<128x128xbf16, #tpu.memory_space<vmem>>, vector<128x128xbf16>
      %cst_34 = arith.constant dense<0.000000e+00> : vector<16x128xf32>
      %40 = tpu.matmul %38, %39, %cst_34 {dimension_numbers = #tpu.dot_dimension_numbers<[1], [0], [0], [1], [0, 0, 1, 1], [], []>} : vector<16x128xbf16>, vector<128x128xbf16>, vector<16x128xf32> -> vector<16x128xf32>
      %c0_35 = arith.constant 0 : index
      %c0_36 = arith.constant 0 : index
      %41 = vector.load %arg12[%c0_35, %c0_36] : memref<1x128xf32, #tpu.memory_space<vmem>>, vector<1x128xf32>
      %42 = vector.broadcast %41 : vector<1x128xf32> to vector<16x128xf32>
      %43 = arith.addf %40, %42 : vector<16x128xf32>
      %44 = tpu.iota {dimensions = array<i32: 1>} : vector<16x128xi32>
      %c2_i32 = arith.constant 2 : i32
      %45 = vector.broadcast %c2_i32 : i32 to vector<16x128xi32>
      %46 = arith.cmpi slt, %44, %45 : vector<16x128xi32>
      %cst_37 = arith.constant -1.000000e+30 : f32
      %47 = vector.broadcast %cst_37 : f32 to vector<16x128xf32>
      %48 = arith.select %46, %43, %47 : vector<16x128xi1>, vector<16x128xf32>
      %cst_38 = arith.constant dense<0xFF800000> : vector<16xf32>
      %49 = vector.multi_reduction <maximumf>, %48, %cst_38 [1] : vector<16x128xf32> to vector<16xf32>
      %50 = vector.shape_cast %49 : vector<16xf32> to vector<16x1xf32>
      %51 = vector.broadcast %50 : vector<16x1xf32> to vector<16x128xf32>
      %52 = arith.subf %48, %51 : vector<16x128xf32>
      %53 = math.exp %52 : vector<16x128xf32>
      %cst_39 = arith.constant dense<0.000000e+00> : vector<16xf32>
      %54 = vector.multi_reduction <add>, %53, %cst_39 [1] : vector<16x128xf32> to vector<16xf32>
      %55 = vector.shape_cast %54 : vector<16xf32> to vector<16x1xf32>
      %56 = tpu.reciprocal %55 {approx = true} : vector<16x1xf32> -> vector<16x1xf32>
      %57 = vector.broadcast %56 : vector<16x1xf32> to vector<16x128xf32>
      %58 = arith.mulf %53, %57 : vector<16x128xf32>
      %c0_40 = arith.constant 0 : index
      %c0_41 = arith.constant 0 : index
      %59 = vector.load %arg13[%c0_40, %c0_41] : memref<16x128xf32, #tpu.memory_space<vmem>>, vector<16x128xf32>
      tpu.vector_store %arg13[%c0_40, %c0_41], %58 {strides = array<i32>} : memref<16x128xf32, #tpu.memory_space<vmem>>, vector<16x128xf32>,
    } else {
    }
    return
  }
  func.func @transform_0(%arg0: i32, %arg1: i32) -> (i32, i32) {
    %c0_i32 = arith.constant 0 : i32
    %c0_i32_0 = arith.constant 0 : i32
    return %arg0, %c0_i32 : i32, i32
  }
  func.func @transform_1(%arg0: i32, %arg1: i32) -> (i32, i32) {
    %c0_i32 = arith.constant 0 : i32
    return %arg0, %arg1 : i32, i32
  }
  func.func @transform_2(%arg0: i32, %arg1: i32) -> (i32, i32) {
    %c0_i32 = arith.constant 0 : i32
    %c0_i32_0 = arith.constant 0 : i32
    %c0_i32_1 = arith.constant 0 : i32
    return %c0_i32, %c0_i32_0 : i32, i32
  }
  func.func @transform_3(%arg0: i32, %arg1: i32) -> (i32, i32) {
    %c0_i32 = arith.constant 0 : i32
    %c0_i32_0 = arith.constant 0 : i32
    %c0_i32_1 = arith.constant 0 : i32
    return %c0_i32, %c0_i32_0 : i32, i32
  }
  func.func @transform_4(%arg0: i32, %arg1: i32) -> (i32, i32) {
    %c0_i32 = arith.constant 0 : i32
    %c0_i32_0 = arith.constant 0 : i32
    return %arg1, %c0_i32 : i32, i32
  }
  func.func @transform_5(%arg0: i32, %arg1: i32) -> (i32, i32) {
    %c0_i32 = arith.constant 0 : i32
    %c0_i32_0 = arith.constant 0 : i32
    %c0_i32_1 = arith.constant 0 : i32
    return %c0_i32, %c0_i32_0 : i32, i32
  }
  func.func @transform_6(%arg0: i32, %arg1: i32) -> (i32, i32) {
    %c0_i32 = arith.constant 0 : i32
    %c0_i32_0 = arith.constant 0 : i32
    %c0_i32_1 = arith.constant 0 : i32
    return %c0_i32, %c0_i32_0 : i32, i32
  }
  func.func @transform_7(%arg0: i32, %arg1: i32) -> (i32, i32) {
    %c0_i32 = arith.constant 0 : i32
    %c0_i32_0 = arith.constant 0 : i32
    %c0_i32_1 = arith.constant 0 : i32
    return %c0_i32, %c0_i32_0 : i32, i32
  }
  func.func @transform_8(%arg0: i32, %arg1: i32) -> (i32, i32) {
    %c0_i32 = arith.constant 0 : i32
    %c0_i32_0 = arith.constant 0 : i32
    %c0_i32_1 = arith.constant 0 : i32
    return %c0_i32, %c0_i32_0 : i32, i32
  }
  func.func @transform_9(%arg0: i32, %arg1: i32) -> (i32, i32) {
    %c0_i32 = arith.constant 0 : i32
    %c0_i32_0 = arith.constant 0 : i32
    %c0_i32_1 = arith.constant 0 : i32
    return %c0_i32, %c0_i32_0 : i32, i32
  }
  func.func @transform_10(%arg0: i32, %arg1: i32) -> (i32, i32) {
    %c0_i32 = arith.constant 0 : i32
    %c0_i32_0 = arith.constant 0 : i32
    %c0_i32_1 = arith.constant 0 : i32
    return %c0_i32, %c0_i32_0 : i32, i32
  }
  func.func @transform_11(%arg0: i32, %arg1: i32) -> (i32, i32) {
    %c0_i32 = arith.constant 0 : i32
    %c0_i32_0 = arith.constant 0 : i32
    return %arg0, %c0_i32 : i32, i32
  }
}

module attributes {stable_mosaic.version = 11 : i64} {
  func.func @_lav_fusion_kernel(%arg0: i32, %arg1: i32, %arg2: memref<16x8xbf16, #tpu.memory_space<vmem>>, %arg3: memref<16x1024xbf16, #tpu.memory_space<vmem>>, %arg4: memref<8x128xbf16, #tpu.memory_space<vmem>>, %arg5: memref<1x128xf32, #tpu.memory_space<vmem>>, %arg6: memref<1024x128xbf16, #tpu.memory_space<vmem>>, %arg7: memref<1x128xf32, #tpu.memory_space<vmem>>, %arg8: memref<128x128xbf16, #tpu.memory_space<vmem>>, %arg9: memref<128x128xbf16, #tpu.memory_space<vmem>>, %arg10: memref<1x128xf32, #tpu.memory_space<vmem>>, %arg11: memref<128x128xbf16, #tpu.memory_space<vmem>>, %arg12: memref<1x128xf32, #tpu.memory_space<vmem>>, %arg13: memref<16x128xf32, #tpu.memory_space<vmem>>, %arg14: memref<16x128xf32, #tpu.memory_space<vmem>>) attributes {dimension_semantics = [#tpu.dimension_semantics<parallel>, #tpu.dimension_semantics<arbitrary>], iteration_bounds = array<i64: 1, 1>, scalar_prefetch = 0 : i64, scratch_operands = 1 : i64, tpu.core_type = #tpu.core_type<tc>, window_params = [{transform_indices = @transform_0, window_bounds = array<i64: 16, 8>}, {transform_indices = @transform_1, window_bounds = array<i64: 16, 1024>}, {pipeline_mode = #tpu.pipeline_mode<synchronous>, transform_indices = @transform_2, window_bounds = array<i64: 8, 128>}, {pipeline_mode = #tpu.pipeline_mode<synchronous>, transform_indices = @transform_3, window_bounds = array<i64: 1, 128>}, {transform_indices = @transform_4, window_bounds = array<i64: 1024, 128>}, {pipeline_mode = #tpu.pipeline_mode<synchronous>, transform_indices = @transform_5, window_bounds = array<i64: 1, 128>}, {pipeline_mode = #tpu.pipeline_mode<synchronous>, transform_indices = @transform_6, window_bounds = array<i64: 128, 128>}, {pipeline_mode = #tpu.pipeline_mode<synchronous>, transform_indices = @transform_7, window_bounds = array<i64: 128, 128>}, {pipeline_mode = #tpu.pipeline_mode<synchronous>, transform_indices = @transform_8, window_bounds = array<i64: 1, 128>}, {pipeline_mode = #tpu.pipeline_mode<synchronous>, transform_indices = @transform_9, window_bounds = array<i64: 128, 128>}, {pipeline_mode = #tpu.pipeline_mode<synchronous>, transform_indices = @transform_10, window_bounds = array<i64: 1, 128>}, {transform_indices = @transform_11, window_bounds = array<i64: 16, 128>}]} {
    %c0_i32 = arith.constant 0 : i32
    %0 = arith.cmpi eq, %arg1, %c0_i32 : i32
    %1 = arith.extui %0 : i1 to i32
    %c0_i32_0 = arith.constant 0 : i32
    %2 = arith.cmpi ne, %1, %c0_i32_0 : i32
    scf.if %2 {
      %cst_10 = arith.constant 0.000000e+00 : f32
      %12 = vector.broadcast %cst_10 : f32 to vector<16x128xf32>
      %c0_11 = arith.constant 0 : index
      %c0_12 = arith.constant 0 : index
      %13 = vector.load %arg14[%c0_11, %c0_12] : memref<16x128xf32, #tpu.memory_space<vmem>>, vector<16x128xf32>
      tpu.vector_store %arg14[%c0_11, %c0_12], %12 {strides = array<i32>} : memref<16x128xf32, #tpu.memory_space<vmem>>, vector<16x128xf32>,
    } else {
    }
    %c0 = arith.constant 0 : index
    %c0_1 = arith.constant 0 : index
    %3 = vector.load %arg14[%c0, %c0_1] : memref<16x128xf32, #tpu.memory_space<vmem>>, vector<16x128xf32>
    %c0_2 = arith.constant 0 : index
    %c0_3 = arith.constant 0 : index
    %4 = vector.load %arg3[%c0_2, %c0_3] : memref<16x1024xbf16, #tpu.memory_space<vmem>>, vector<16x1024xbf16>
    %c0_4 = arith.constant 0 : index
    %c0_5 = arith.constant 0 : index
    %5 = vector.load %arg6[%c0_4, %c0_5] : memref<1024x128xbf16, #tpu.memory_space<vmem>>, vector<1024x128xbf16>
    %cst = arith.constant dense<0.000000e+00> : vector<16x128xf32>
    %6 = tpu.matmul %4, %5, %cst {dimension_numbers = #tpu.dot_dimension_numbers<[1], [0], [0], [1], [0, 0, 1, 1], [], []>} : vector<16x1024xbf16>, vector<1024x128xbf16>, vector<16x128xf32> -> vector<16x128xf32>
    %7 = arith.addf %3, %6 : vector<16x128xf32>
    %c0_6 = arith.constant 0 : index
    %c0_7 = arith.constant 0 : index
    %8 = vector.load %arg14[%c0_6, %c0_7] : memref<16x128xf32, #tpu.memory_space<vmem>>, vector<16x128xf32>
    tpu.vector_store %arg14[%c0_6, %c0_7], %7 {strides = array<i32>} : memref<16x128xf32, #tpu.memory_space<vmem>>, vector<16x128xf32>,
    %c0_i32_8 = arith.constant 0 : i32
    %9 = arith.cmpi eq, %arg1, %c0_i32_8 : i32
    %10 = arith.extui %9 : i1 to i32
    %c0_i32_9 = arith.constant 0 : i32
    %11 = arith.cmpi ne, %10, %c0_i32_9 : i32
    scf.if %11 {
      %c0_10 = arith.constant 0 : index
      %c0_11 = arith.constant 0 : index
      %12 = vector.load %arg2[%c0_10, %c0_11] : memref<16x8xbf16, #tpu.memory_space<vmem>>, vector<16x8xbf16>
      %c0_12 = arith.constant 0 : index
      %c0_13 = arith.constant 0 : index
      %13 = vector.load %arg4[%c0_12, %c0_13] : memref<8x128xbf16, #tpu.memory_space<vmem>>, vector<8x128xbf16>
      %cst_14 = arith.constant dense<0.000000e+00> : vector<16x128xf32>
      %14 = tpu.matmul %12, %13, %cst_14 {dimension_numbers = #tpu.dot_dimension_numbers<[1], [0], [0], [1], [0, 0, 1, 1], [], []>} : vector<16x8xbf16>, vector<8x128xbf16>, vector<16x128xf32> -> vector<16x128xf32>
      %c0_15 = arith.constant 0 : index
      %c0_16 = arith.constant 0 : index
      %15 = vector.load %arg5[%c0_15, %c0_16] : memref<1x128xf32, #tpu.memory_space<vmem>>, vector<1x128xf32>
      %16 = vector.broadcast %15 : vector<1x128xf32> to vector<16x128xf32>
      %17 = arith.addf %14, %16 : vector<16x128xf32>
      %cst_17 = arith.constant 0.000000e+00 : f32
      %18 = vector.broadcast %cst_17 : f32 to vector<16x128xf32>
      %19 = arith.maximumf %17, %18 : vector<16x128xf32>
      %c0_18 = arith.constant 0 : index
      %c0_19 = arith.constant 0 : index
      %20 = vector.load %arg14[%c0_18, %c0_19] : memref<16x128xf32, #tpu.memory_space<vmem>>, vector<16x128xf32>
      %c0_20 = arith.constant 0 : index
      %c0_21 = arith.constant 0 : index
      %21 = vector.load %arg7[%c0_20, %c0_21] : memref<1x128xf32, #tpu.memory_space<vmem>>, vector<1x128xf32>
      %22 = vector.broadcast %21 : vector<1x128xf32> to vector<16x128xf32>
      %23 = arith.addf %20, %22 : vector<16x128xf32>
      %cst_22 = arith.constant 0.000000e+00 : f32
      %24 = vector.broadcast %cst_22 : f32 to vector<16x128xf32>
      %25 = arith.maximumf %23, %24 : vector<16x128xf32>
      %26 = arith.truncf %19 : vector<16x128xf32> to vector<16x128xbf16>
      %c0_23 = arith.constant 0 : index
      %c0_24 = arith.constant 0 : index
      %27 = vector.load %arg8[%c0_23, %c0_24] : memref<128x128xbf16, #tpu.memory_space<vmem>>, vector<128x128xbf16>
      %cst_25 = arith.constant dense<0.000000e+00> : vector<16x128xf32>
      %28 = tpu.matmul %26, %27, %cst_25 {dimension_numbers = #tpu.dot_dimension_numbers<[1], [0], [0], [1], [0, 0, 1, 1], [], []>} : vector<16x128xbf16>, vector<128x128xbf16>, vector<16x128xf32> -> vector<16x128xf32>
      %29 = arith.truncf %25 : vector<16x128xf32> to vector<16x128xbf16>
      %c0_26 = arith.constant 0 : index
      %c0_27 = arith.constant 0 : index
      %30 = vector.load %arg9[%c0_26, %c0_27] : memref<128x128xbf16, #tpu.memory_space<vmem>>, vector<128x128xbf16>
      %cst_28 = arith.constant dense<0.000000e+00> : vector<16x128xf32>
      %31 = tpu.matmul %29, %30, %cst_28 {dimension_numbers = #tpu.dot_dimension_numbers<[1], [0], [0], [1], [0, 0, 1, 1], [], []>} : vector<16x128xbf16>, vector<128x128xbf16>, vector<16x128xf32> -> vector<16x128xf32>
      %32 = arith.addf %28, %31 : vector<16x128xf32>
      %c0_29 = arith.constant 0 : index
      %c0_30 = arith.constant 0 : index
      %33 = vector.load %arg10[%c0_29, %c0_30] : memref<1x128xf32, #tpu.memory_space<vmem>>, vector<1x128xf32>
      %34 = vector.broadcast %33 : vector<1x128xf32> to vector<16x128xf32>
      %35 = arith.addf %32, %34 : vector<16x128xf32>
      %cst_31 = arith.constant 0.000000e+00 : f32
      %36 = vector.broadcast %cst_31 : f32 to vector<16x128xf32>
      %37 = arith.maximumf %35, %36 : vector<16x128xf32>
      %38 = arith.truncf %37 : vector<16x128xf32> to vector<16x128xbf16>
      %c0_32 = arith.constant 0 : index
      %c0_33 = arith.constant 0 : index
      %39 = vector.load %arg11[%c0_32, %c0_33] : memref<128x128xbf16, #tpu.memory_space<vmem>>, vector<128x128xbf16>
      %cst_34 = arith.constant dense<0.000000e+00> : vector<16x128xf32>
      %40 = tpu.matmul %38, %39, %cst_34 {dimension_numbers = #tpu.dot_dimension_numbers<[1], [0], [0], [1], [0, 0, 1, 1], [], []>} : vector<16x128xbf16>, vector<128x128xbf16>, vector<16x128xf32> -> vector<16x128xf32>
      %c0_35 = arith.constant 0 : index
      %c0_36 = arith.constant 0 : index
      %41 = vector.load %arg12[%c0_35, %c0_36] : memref<1x128xf32, #tpu.memory_space<vmem>>, vector<1x128xf32>
      %42 = vector.broadcast %41 : vector<1x128xf32> to vector<16x128xf32>
      %43 = arith.addf %40, %42 : vector<16x128xf32>
      %44 = tpu.iota {dimensions = array<i32: 1>} : vector<16x128xi32>
      %c2_i32 = arith.constant 2 : i32
      %45 = vector.broadcast %c2_i32 : i32 to vector<16x128xi32>
      %46 = arith.cmpi slt, %44, %45 : vector<16x128xi32>
      %cst_37 = arith.constant -1.000000e+30 : f32
      %47 = vector.broadcast %cst_37 : f32 to vector<16x128xf32>
      %48 = arith.select %46, %43, %47 : vector<16x128xi1>, vector<16x128xf32>
      %cst_38 = arith.constant dense<0xFF800000> : vector<16xf32>
      %49 = vector.multi_reduction <maximumf>, %48, %cst_38 [1] : vector<16x128xf32> to vector<16xf32>
      %50 = vector.shape_cast %49 : vector<16xf32> to vector<16x1xf32>
      %51 = vector.broadcast %50 : vector<16x1xf32> to vector<16x128xf32>
      %52 = arith.subf %48, %51 : vector<16x128xf32>
      %53 = math.exp %52 : vector<16x128xf32>
      %cst_39 = arith.constant dense<0.000000e+00> : vector<16xf32>
      %54 = vector.multi_reduction <add>, %53, %cst_39 [1] : vector<16x128xf32> to vector<16xf32>
      %55 = vector.shape_cast %54 : vector<16xf32> to vector<16x1xf32>
      %56 = tpu.reciprocal %55 {approx = true} : vector<16x1xf32> -> vector<16x1xf32>
      %57 = vector.broadcast %56 : vector<16x1xf32> to vector<16x128xf32>
      %58 = arith.mulf %53, %57 : vector<16x128xf32>
      %c0_40 = arith.constant 0 : index
      %c0_41 = arith.constant 0 : index
      %59 = vector.load %arg13[%c0_40, %c0_41] : memref<16x128xf32, #tpu.memory_space<vmem>>, vector<16x128xf32>
      tpu.vector_store %arg13[%c0_40, %c0_41], %58 {strides = array<i32>} : memref<16x128xf32, #tpu.memory_space<vmem>>, vector<16x128xf32>,
    } else {
    }
    return
  }
  func.func @transform_0(%arg0: i32, %arg1: i32) -> (i32, i32) {
    %c0_i32 = arith.constant 0 : i32
    %c0_i32_0 = arith.constant 0 : i32
    return %arg0, %c0_i32 : i32, i32
  }
  func.func @transform_1(%arg0: i32, %arg1: i32) -> (i32, i32) {
    %c0_i32 = arith.constant 0 : i32
    return %arg0, %arg1 : i32, i32
  }
  func.func @transform_2(%arg0: i32, %arg1: i32) -> (i32, i32) {
    %c0_i32 = arith.constant 0 : i32
    %c0_i32_0 = arith.constant 0 : i32
    %c0_i32_1 = arith.constant 0 : i32
    return %c0_i32, %c0_i32_0 : i32, i32
  }
  func.func @transform_3(%arg0: i32, %arg1: i32) -> (i32, i32) {
    %c0_i32 = arith.constant 0 : i32
    %c0_i32_0 = arith.constant 0 : i32
    %c0_i32_1 = arith.constant 0 : i32
    return %c0_i32, %c0_i32_0 : i32, i32
  }
  func.func @transform_4(%arg0: i32, %arg1: i32) -> (i32, i32) {
    %c0_i32 = arith.constant 0 : i32
    %c0_i32_0 = arith.constant 0 : i32
    return %arg1, %c0_i32 : i32, i32
  }
  func.func @transform_5(%arg0: i32, %arg1: i32) -> (i32, i32) {
    %c0_i32 = arith.constant 0 : i32
    %c0_i32_0 = arith.constant 0 : i32
    %c0_i32_1 = arith.constant 0 : i32
    return %c0_i32, %c0_i32_0 : i32, i32
  }
  func.func @transform_6(%arg0: i32, %arg1: i32) -> (i32, i32) {
    %c0_i32 = arith.constant 0 : i32
    %c0_i32_0 = arith.constant 0 : i32
    %c0_i32_1 = arith.constant 0 : i32
    return %c0_i32, %c0_i32_0 : i32, i32
  }
  func.func @transform_7(%arg0: i32, %arg1: i32) -> (i32, i32) {
    %c0_i32 = arith.constant 0 : i32
    %c0_i32_0 = arith.constant 0 : i32
    %c0_i32_1 = arith.constant 0 : i32
    return %c0_i32, %c0_i32_0 : i32, i32
  }
  func.func @transform_8(%arg0: i32, %arg1: i32) -> (i32, i32) {
    %c0_i32 = arith.constant 0 : i32
    %c0_i32_0 = arith.constant 0 : i32
    %c0_i32_1 = arith.constant 0 : i32
    return %c0_i32, %c0_i32_0 : i32, i32
  }
  func.func @transform_9(%arg0: i32, %arg1: i32) -> (i32, i32) {
    %c0_i32 = arith.constant 0 : i32
    %c0_i32_0 = arith.constant 0 : i32
    %c0_i32_1 = arith.constant 0 : i32
    return %c0_i32, %c0_i32_0 : i32, i32
  }
  func.func @transform_10(%arg0: i32, %arg1: i32) -> (i32, i32) {
    %c0_i32 = arith.constant 0 : i32
    %c0_i32_0 = arith.constant 0 : i32
    %c0_i32_1 = arith.constant 0 : i32
    return %c0_i32, %c0_i32_0 : i32, i32
  }
  func.func @transform_11(%arg0: i32, %arg1: i32) -> (i32, i32) {
    %c0_i32 = arith.constant 0 : i32
    %c0_i32_0 = arith.constant 0 : i32
    return %arg0, %c0_i32 : i32, i32
  }
}

</mosaic_0001>

<llo_original>
// kernel: tpu_custom_call.1
$region0: #{tpu_custom_call.1}
  #allocation0 [shape = 'u32[]', space=smem, size = 0x4, offset = 0x4, fixed_abs, tag = 'smem constant byte address 0x4 - core index']
  #allocation1 [shape = 'u32[144,128]{1,0:T(1,128)}', space=vmem, size = 0x12000, scoped, tag = 'internal scratch']
  #allocation2 [shape = 'f32[16,128]{1,0:T(8,128)}', space=vmem, size = 0x2000, scoped, tag = 'scratch operand']
  %s0 = inlined_call_operand.vmem [shape: bf16[16,8], index: 0, kind: input, shape index: {}]
  %s1 = inlined_call_operand.hbm [shape: bf16[16,1024], index: 1, kind: input, shape index: {}]
  %s2 = inlined_call_operand.vmem [shape: bf16[8,128], index: 2, kind: input, shape index: {}]
  %s3 = inlined_call_operand.vmem [shape: f32[1,128], index: 3, kind: input, shape index: {}]
  %s4 = inlined_call_operand.hbm [shape: bf16[1024,128], index: 4, kind: input, shape index: {}]
  %s5 = inlined_call_operand.vmem [shape: f32[1,128], index: 5, kind: input, shape index: {}]
  %s6 = inlined_call_operand.hbm [shape: bf16[128,128], index: 6, kind: input, shape index: {}]
  %s7 = inlined_call_operand.hbm [shape: bf16[128,128], index: 7, kind: input, shape index: {}]
  %s8 = inlined_call_operand.vmem [shape: f32[1,128], index: 8, kind: input, shape index: {}]
  %s9 = inlined_call_operand.hbm [shape: bf16[128,128], index: 9, kind: input, shape index: {}]
  %s10 = inlined_call_operand.vmem [shape: f32[1,128], index: 10, kind: input, shape index: {}]
  %s11 = inlined_call_operand.hbm [shape: f32[16,128], index: 11, kind: output, shape index: {}]
  %s12 = sld [smem:[#allocation0]]
  $region82: #{tpu_custom_call.1} parent=0
    _
  %s14 = ssub.s32 1, %s12
  %s15 = scalar_select 0, %s14, %s12
  $region1: #{tpu_custom_call.1} parent=0
    #allocation3 [shape = 'u8[32768]{0}', space=vmem, size = 0x8000, scoped, tag = 'input window, operand 1, single buffered']
    #allocation4 [shape = 's32[1]{0}', space=sflag, size = 0x4, scoped, tag = 'scoped memory for tpu_custom_call.1']
    #allocation5 [shape = 's32[1]{0}', space=sflag, size = 0x4, scoped, tag = 'scoped memory for tpu_custom_call.1']
    #allocation6 [shape = 'u8[262144]{0}', space=vmem, size = 0x40000, scoped, tag = 'input window, operand 4, single buffered']
    #allocation7 [shape = 's32[1]{0}', space=sflag, size = 0x4, scoped, tag = 'scoped memory for tpu_custom_call.1']
    #allocation8 [shape = 'u8[32768]{0}', space=vmem, size = 0x8000, scoped, tag = 'input window, operand 6, single buffered']
    #allocation9 [shape = 'u8[32768]{0}', space=vmem, size = 0x8000, scoped, tag = 'input window, operand 7, single buffered']
    #allocation10 [shape = 's32[1]{0}', space=sflag, size = 0x4, scoped, tag = 'scoped memory for tpu_custom_call.1']
    #allocation11 [shape = 'u8[32768]{0}', space=vmem, size = 0x8000, scoped, tag = 'input window, operand 9, single buffered']
    #allocation12 [shape = 'u8[8192]{0}', space=vmem, size = 0x2000, scoped, tag = 'output window, operand 0, single buffered']
    %16 = vsyncpa [#allocation4], 0
    %17 = vsyncpa [#allocation7], 0
    %18 = vsyncpa [#allocation10], 0
    %19 = vsyncpa [#allocation5], 0
    // Predicated region
    $region2: #{tpu_custom_call.1} parent=1 // pred_check
      _
    $region3: #{tpu_custom_call.1} parent=1 // pred_check_branch
      %21 = sbr.rel (0) target = $region5
    $region4: #{tpu_custom_call.1} parent=1 // pred_region
      _
    $region5: #{tpu_custom_call.1} parent=1 // pred_fallthru
      _
    // Predicated region
    $region6: #{tpu_custom_call.1} parent=1 // pred_check
      _
    $region7: #{tpu_custom_call.1} parent=1 // pred_check_branch
      %23 = sbr.rel (0) target = $region9
    $region8: #{tpu_custom_call.1} parent=1 // pred_region
      %s25 = ssub.s32 1024, 1024
      %26 = vsyncadd [#allocation4], %s25
      %s27 = sshll.u32 [#allocation3], 4
      %s28 = int_to_ptr.vmem [resolvable:$true] %s27
      %33 = dma.hbm_to_vmem [thread:$0]  %s1, 1024, %s28, [#allocation4], 512, 512, 32
    $region9: #{tpu_custom_call.1} parent=1 // pred_fallthru
      _
    // Predicated region
    $region10: #{tpu_custom_call.1} parent=1 // pred_check
      _
    $region11: #{tpu_custom_call.1} parent=1 // pred_check_branch
      %35 = sbr.rel (0) target = $region13
    $region12: #{tpu_custom_call.1} parent=1 // pred_region
      _
    $region13: #{tpu_custom_call.1} parent=1 // pred_fallthru
      _
    // Predicated region
    $region14: #{tpu_custom_call.1} parent=1 // pred_check
      _
    $region15: #{tpu_custom_call.1} parent=1 // pred_check_branch
      %37 = sbr.rel (0) target = $region17
    $region16: #{tpu_custom_call.1} parent=1 // pred_region
      _
    $region17: #{tpu_custom_call.1} parent=1 // pred_fallthru
      _
    // Predicated region
    $region18: #{tpu_custom_call.1} parent=1 // pred_check
      _
    $region19: #{tpu_custom_call.1} parent=1 // pred_check_branch
      %39 = sbr.rel (0) target = $region21
    $region20: #{tpu_custom_call.1} parent=1 // pred_region
      %s41 = ssub.s32 8192, 8192
      %42 = vsyncadd [#allocation7], %s41
      %s43 = sshll.u32 [#allocation6], 4
      %s44 = int_to_ptr.vmem [resolvable:$true] %s43
      %49 = dma.hbm_to_vmem [thread:$0]  %s4, 8192, %s44, [#allocation7], 64, 64, 4
    $region21: #{tpu_custom_call.1} parent=1 // pred_fallthru
      _
    // Predicated region
    $region22: #{tpu_custom_call.1} parent=1 // pred_check
      _
    $region23: #{tpu_custom_call.1} parent=1 // pred_check_branch
      %51 = sbr.rel (0) target = $region25
    $region24: #{tpu_custom_call.1} parent=1 // pred_region
      _
    $region25: #{tpu_custom_call.1} parent=1 // pred_fallthru
      _
    // Predicated region
    $region26: #{tpu_custom_call.1} parent=1 // pred_check
      _
    $region27: #{tpu_custom_call.1} parent=1 // pred_check_branch
      %53 = sbr.rel (0) target = $region29
    $region28: #{tpu_custom_call.1} parent=1 // pred_region
      %s55 = ssub.s32 1024, 1024
      %56 = vsyncadd [#allocation7], %s55
      %s57 = sshll.u32 [#allocation8], 4
      %s58 = int_to_ptr.vmem [resolvable:$true] %s57
      %63 = dma.hbm_to_vmem [thread:$0]  %s6, 1024, %s58, [#allocation7], 64, 64, 4
    $region29: #{tpu_custom_call.1} parent=1 // pred_fallthru
      _
    // Predicated region
    $region30: #{tpu_custom_call.1} parent=1 // pred_check
      _
    $region31: #{tpu_custom_call.1} parent=1 // pred_check_branch
      %65 = sbr.rel (0) target = $region33
    $region32: #{tpu_custom_call.1} parent=1 // pred_region
      %s67 = ssub.s32 1024, 1024
      %68 = vsyncadd [#allocation10], %s67
      %s69 = sshll.u32 [#allocation9], 4
      %s70 = int_to_ptr.vmem [resolvable:$true] %s69
      %75 = dma.hbm_to_vmem [thread:$0]  %s7, 1024, %s70, [#allocation10], 64, 64, 4
    $region33: #{tpu_custom_call.1} parent=1 // pred_fallthru
      _
    // Predicated region
    $region34: #{tpu_custom_call.1} parent=1 // pred_check
      _
    $region35: #{tpu_custom_call.1} parent=1 // pred_check_branch
      %77 = sbr.rel (0) target = $region37
    $region36: #{tpu_custom_call.1} parent=1 // pred_region
      _
    $region37: #{tpu_custom_call.1} parent=1 // pred_fallthru
      _
    // Predicated region
    $region38: #{tpu_custom_call.1} parent=1 // pred_check
      _
    $region39: #{tpu_custom_call.1} parent=1 // pred_check_branch
      %79 = sbr.rel (0) target = $region41
    $region40: #{tpu_custom_call.1} parent=1 // pred_region
      %s81 = ssub.s32 1024, 1024
      %82 = vsyncadd [#allocation10], %s81
      %s83 = sshll.u32 [#allocation11], 4
      %s84 = int_to_ptr.vmem [resolvable:$true] %s83
      %89 = dma.hbm_to_vmem [thread:$0]  %s9, 1024, %s84, [#allocation10], 64, 64, 4
    $region41: #{tpu_custom_call.1} parent=1 // pred_fallthru
      _
    // Predicated region
    $region42: #{tpu_custom_call.1} parent=1 // pred_check
      _
    $region43: #{tpu_custom_call.1} parent=1 // pred_check_branch
      %91 = sbr.rel (0) target = $region45
    $region44: #{tpu_custom_call.1} parent=1 // pred_region
      _
    $region45: #{tpu_custom_call.1} parent=1 // pred_fallthru
      _
    // Predicated region
    $region46: #{tpu_custom_call.1} parent=1 // pred_check
      _
    $region47: #{tpu_custom_call.1} parent=1 // pred_check_branch
      %93 = sbr.rel (0) target = $region49
    $region48: #{tpu_custom_call.1} parent=1 // pred_region
      %94 = dma.done [#allocation4], 1024
    $region49: #{tpu_custom_call.1} parent=1 // pred_fallthru
      _
    // Predicated region
    $region50: #{tpu_custom_call.1} parent=1 // pred_check
      _
    $region51: #{tpu_custom_call.1} parent=1 // pred_check_branch
      %96 = sbr.rel (0) target = $region53
    $region52: #{tpu_custom_call.1} parent=1 // pred_region
      %97 = dma.done [#allocation7], 8192
    $region53: #{tpu_custom_call.1} parent=1 // pred_fallthru
      _
    // Predicated region
    $region54: #{tpu_custom_call.1} parent=1 // pred_check
      _
    $region55: #{tpu_custom_call.1} parent=1 // pred_check_branch
      %99 = sbr.rel (0) target = $region57
    $region56: #{tpu_custom_call.1} parent=1 // pred_region
      %100 = dma.done [#allocation7], 1024
    $region57: #{tpu_custom_call.1} parent=1 // pred_fallthru
      _
    // Predicated region
    $region58: #{tpu_custom_call.1} parent=1 // pred_check
      _
    $region59: #{tpu_custom_call.1} parent=1 // pred_check_branch
      %102 = sbr.rel (0) target = $region61
    $region60: #{tpu_custom_call.1} parent=1 // pred_region
      %103 = dma.done [#allocation10], 1024
    $region61: #{tpu_custom_call.1} parent=1 // pred_fallthru
      _
    // Predicated region
    $region62: #{tpu_custom_call.1} parent=1 // pred_check
      _
    $region63: #{tpu_custom_call.1} parent=1 // pred_check_branch
      %105 = sbr.rel (0) target = $region65
    $region64: #{tpu_custom_call.1} parent=1 // pred_region
      %106 = dma.done [#allocation10], 1024
    $region65: #{tpu_custom_call.1} parent=1 // pred_fallthru
      _
    %p108 = scmp.eq.s32.totalorder 0, 0
    // Predicated region
    $region66: #{tpu_custom_call.1} parent=1 // pred_check
      %p109 = pneg %p108
    $region67: #{tpu_custom_call.1} parent=1 // pred_check_branch
      %111 = sbr.rel (%p109) target = $region69
    $region68: #{tpu_custom_call.1} parent=1 // pred_region
      %112 = vst [vmem:[#allocation2] sm:$0xff] 0.0
      %113 = vst [vmem:[#allocation2 + $0x8] sm:$0xff] 0.0
    $region69: #{tpu_custom_call.1} parent=1 // pred_fallthru
      _
    %v114 = vld [vmem:[#allocation2] sm:$0xff]
    %v115 = vld [vmem:[#allocation2 + $0x8] sm:$0xff]
    %v116 = vld [vmem:[#allocation3] sm:$0xff]
    %v117 = vld [vmem:[#allocation3 + $0x8] sm:$0xff]
    %v118 = vld [vmem:[#allocation3 + $0x10] sm:$0xff]
    %v119 = vld [vmem:[#allocation3 + $0x18] sm:$0xff]
    %v120 = vld [vmem:[#allocation3 + $0x20] sm:$0xff]
    %v121 = vld [vmem:[#allocation3 + $0x28] sm:$0xff]
    %v122 = vld [vmem:[#allocation3 + $0x30] sm:$0xff]
    %v123 = vld [vmem:[#allocation3 + $0x38] sm:$0xff]
    %v124 = vld [vmem:[#allocation6] sm:$0xf]
    %v125 = vld [vmem:[#allocation6 + $0x4] sm:$0xf]
    %v126 = vld [vmem:[#allocation6 + $0x8] sm:$0xf]
    %v127 = vld [vmem:[#allocation6 + $0xc] sm:$0xf]
    %v128 = vld [vmem:[#allocation6 + $0x10] sm:$0xf]
    %v129 = vld [vmem:[#allocation6 + $0x14] sm:$0xf]
    %v130 = vld [vmem:[#allocation6 + $0x18] sm:$0xf]
    %v131 = vld [vmem:[#allocation6 + $0x1c] sm:$0xf]
    %v132 = vld [vmem:[#allocation6 + $0x20] sm:$0xf]
    %v133 = vld [vmem:[#allocation6 + $0x24] sm:$0xf]
    %v134 = vld [vmem:[#allocation6 + $0x28] sm:$0xf]
    %v135 = vld [vmem:[#allocation6 + $0x2c] sm:$0xf]
    %v136 = vld [vmem:[#allocation6 + $0x30] sm:$0xf]
    %v137 = vld [vmem:[#allocation6 + $0x34] sm:$0xf]
    %v138 = vld [vmem:[#allocation6 + $0x38] sm:$0xf]
    %v139 = vld [vmem:[#allocation6 + $0x3c] sm:$0xf]
    %v140 = vld [vmem:[#allocation6 + $0x40] sm:$0xf]
    %v141 = vld [vmem:[#allocation6 + $0x44] sm:$0xf]
    %v142 = vld [vmem:[#allocation6 + $0x48] sm:$0xf]
    %v143 = vld [vmem:[#allocation6 + $0x4c] sm:$0xf]
    %v144 = vld [vmem:[#allocation6 + $0x50] sm:$0xf]
    %v145 = vld [vmem:[#allocation6 + $0x54] sm:$0xf]
    %v146 = vld [vmem:[#allocation6 + $0x58] sm:$0xf]
    %v147 = vld [vmem:[#allocation6 + $0x5c] sm:$0xf]
    %v148 = vld [vmem:[#allocation6 + $0x60] sm:$0xf]
    %v149 = vld [vmem:[#allocation6 + $0x64] sm:$0xf]
    %v150 = vld [vmem:[#allocation6 + $0x68] sm:$0xf]
    %v151 = vld [vmem:[#allocation6 + $0x6c] sm:$0xf]
    %v152 = vld [vmem:[#allocation6 + $0x70] sm:$0xf]
    %v153 = vld [vmem:[#allocation6 + $0x74] sm:$0xf]
    %v154 = vld [vmem:[#allocation6 + $0x78] sm:$0xf]
    %v155 = vld [vmem:[#allocation6 + $0x7c] sm:$0xf]
    %v156 = vld [vmem:[#allocation6 + $0x80] sm:$0xf]
    %v157 = vld [vmem:[#allocation6 + $0x84] sm:$0xf]
    %v158 = vld [vmem:[#allocation6 + $0x88] sm:$0xf]
    %v159 = vld [vmem:[#allocation6 + $0x8c] sm:$0xf]
    %v160 = vld [vmem:[#allocation6 + $0x90] sm:$0xf]
    %v161 = vld [vmem:[#allocation6 + $0x94] sm:$0xf]
    %v162 = vld [vmem:[#allocation6 + $0x98] sm:$0xf]
    %v163 = vld [vmem:[#allocation6 + $0x9c] sm:$0xf]
    %v164 = vld [vmem:[#allocation6 + $0xa0] sm:$0xf]
    %v165 = vld [vmem:[#allocation6 + $0xa4] sm:$0xf]
    %v166 = vld [vmem:[#allocation6 + $0xa8] sm:$0xf]
    %v167 = vld [vmem:[#allocation6 + $0xac] sm:$0xf]
    %v168 = vld [vmem:[#allocation6 + $0xb0] sm:$0xf]
    %v169 = vld [vmem:[#allocation6 + $0xb4] sm:$0xf]
    %v170 = vld [vmem:[#allocation6 + $0xb8] sm:$0xf]
    %v171 = vld [vmem:[#allocation6 + $0xbc] sm:$0xf]
    %v172 = vld [vmem:[#allocation6 + $0xc0] sm:$0xf]
    %v173 = vld [vmem:[#allocation6 + $0xc4] sm:$0xf]
    %v174 = vld [vmem:[#allocation6 + $0xc8] sm:$0xf]
    %v175 = vld [vmem:[#allocation6 + $0xcc] sm:$0xf]
    %v176 = vld [vmem:[#allocation6 + $0xd0] sm:$0xf]
    %v177 = vld [vmem:[#allocation6 + $0xd4] sm:$0xf]
    %v178 = vld [vmem:[#allocation6 + $0xd8] sm:$0xf]
    %v179 = vld [vmem:[#allocation6 + $0xdc] sm:$0xf]
    %v180 = vld [vmem:[#allocation6 + $0xe0] sm:$0xf]
    %v181 = vld [vmem:[#allocation6 + $0xe4] sm:$0xf]
    %v182 = vld [vmem:[#allocation6 + $0xe8] sm:$0xf]
    %v183 = vld [vmem:[#allocation6 + $0xec] sm:$0xf]
    %v184 = vld [vmem:[#allocation6 + $0xf0] sm:$0xf]
    %v185 = vld [vmem:[#allocation6 + $0xf4] sm:$0xf]
    %v186 = vld [vmem:[#allocation6 + $0xf8] sm:$0xf]
    %v187 = vld [vmem:[#allocation6 + $0xfc] sm:$0xf]
    %v188 = vld [vmem:[#allocation6 + $0x100] sm:$0xf]
    %v189 = vld [vmem:[#allocation6 + $0x104] sm:$0xf]
    %v190 = vld [vmem:[#allocation6 + $0x108] sm:$0xf]
    %v191 = vld [vmem:[#allocation6 + $0x10c] sm:$0xf]
    %v192 = vld [vmem:[#allocation6 + $0x110] sm:$0xf]
    %v193 = vld [vmem:[#allocation6 + $0x114] sm:$0xf]
    %v194 = vld [vmem:[#allocation6 + $0x118] sm:$0xf]
    %v195 = vld [vmem:[#allocation6 + $0x11c] sm:$0xf]
    %v196 = vld [vmem:[#allocation6 + $0x120] sm:$0xf]
    %v197 = vld [vmem:[#allocation6 + $0x124] sm:$0xf]
    %v198 = vld [vmem:[#allocation6 + $0x128] sm:$0xf]
    %v199 = vld [vmem:[#allocation6 + $0x12c] sm:$0xf]
    %v200 = vld [vmem:[#allocation6 + $0x130] sm:$0xf]
    %v201 = vld [vmem:[#allocation6 + $0x134] sm:$0xf]
    %v202 = vld [vmem:[#allocation6 + $0x138] sm:$0xf]
    %v203 = vld [vmem:[#allocation6 + $0x13c] sm:$0xf]
    %v204 = vld [vmem:[#allocation6 + $0x140] sm:$0xf]
    %v205 = vld [vmem:[#allocation6 + $0x144] sm:$0xf]
    %v206 = vld [vmem:[#allocation6 + $0x148] sm:$0xf]
    %v207 = vld [vmem:[#allocation6 + $0x14c] sm:$0xf]
    %v208 = vld [vmem:[#allocation6 + $0x150] sm:$0xf]
    %v209 = vld [vmem:[#allocation6 + $0x154] sm:$0xf]
    %v210 = vld [vmem:[#allocation6 + $0x158] sm:$0xf]
    %v211 = vld [vmem:[#allocation6 + $0x15c] sm:$0xf]
    %v212 = vld [vmem:[#allocation6 + $0x160] sm:$0xf]
    %v213 = vld [vmem:[#allocation6 + $0x164] sm:$0xf]
    %v214 = vld [vmem:[#allocation6 + $0x168] sm:$0xf]
    %v215 = vld [vmem:[#allocation6 + $0x16c] sm:$0xf]
    %v216 = vld [vmem:[#allocation6 + $0x170] sm:$0xf]
    %v217 = vld [vmem:[#allocation6 + $0x174] sm:$0xf]
    %v218 = vld [vmem:[#allocation6 + $0x178] sm:$0xf]
    %v219 = vld [vmem:[#allocation6 + $0x17c] sm:$0xf]
    %v220 = vld [vmem:[#allocation6 + $0x180] sm:$0xf]
    %v221 = vld [vmem:[#allocation6 + $0x184] sm:$0xf]
    %v222 = vld [vmem:[#allocation6 + $0x188] sm:$0xf]
    %v223 = vld [vmem:[#allocation6 + $0x18c] sm:$0xf]
    %v224 = vld [vmem:[#allocation6 + $0x190] sm:$0xf]
    %v225 = vld [vmem:[#allocation6 + $0x194] sm:$0xf]
    %v226 = vld [vmem:[#allocation6 + $0x198] sm:$0xf]
    %v227 = vld [vmem:[#allocation6 + $0x19c] sm:$0xf]
    %v228 = vld [vmem:[#allocation6 + $0x1a0] sm:$0xf]
    %v229 = vld [vmem:[#allocation6 + $0x1a4] sm:$0xf]
    %v230 = vld [vmem:[#allocation6 + $0x1a8] sm:$0xf]
    %v231 = vld [vmem:[#allocation6 + $0x1ac] sm:$0xf]
    %v232 = vld [vmem:[#allocation6 + $0x1b0] sm:$0xf]
    %v233 = vld [vmem:[#allocation6 + $0x1b4] sm:$0xf]
    %v234 = vld [vmem:[#allocation6 + $0x1b8] sm:$0xf]
    %v235 = vld [vmem:[#allocation6 + $0x1bc] sm:$0xf]
    %v236 = vld [vmem:[#allocation6 + $0x1c0] sm:$0xf]
    %v237 = vld [vmem:[#allocation6 + $0x1c4] sm:$0xf]
    %v238 = vld [vmem:[#allocation6 + $0x1c8] sm:$0xf]
    %v239 = vld [vmem:[#allocation6 + $0x1cc] sm:$0xf]
    %v240 = vld [vmem:[#allocation6 + $0x1d0] sm:$0xf]
    %v241 = vld [vmem:[#allocation6 + $0x1d4] sm:$0xf]
    %v242 = vld [vmem:[#allocation6 + $0x1d8] sm:$0xf]
    %v243 = vld [vmem:[#allocation6 + $0x1dc] sm:$0xf]
    %v244 = vld [vmem:[#allocation6 + $0x1e0] sm:$0xf]
    %v245 = vld [vmem:[#allocation6 + $0x1e4] sm:$0xf]
    %v246 = vld [vmem:[#allocation6 + $0x1e8] sm:$0xf]
    %v247 = vld [vmem:[#allocation6 + $0x1ec] sm:$0xf]
    %v248 = vld [vmem:[#allocation6 + $0x1f0] sm:$0xf]
    %v249 = vld [vmem:[#allocation6 + $0x1f4] sm:$0xf]
    %v250 = vld [vmem:[#allocation6 + $0x1f8] sm:$0xf]
    %v251 = vld [vmem:[#allocation6 + $0x1fc] sm:$0xf]
    %v260 = vunpack.c.l.b16 %v116
    %v261 = vunpack.c.h.b16 %v116
    %v262 = vunpack.c.l.b16 %v117
    %v263 = vunpack.c.h.b16 %v117
    %v264 = vunpack.c.l.b16 %v118
    %v265 = vunpack.c.h.b16 %v118
    %v266 = vunpack.c.l.b16 %v119
    %v267 = vunpack.c.h.b16 %v119
    %v268 = vunpack.c.l.b16 %v120
    %v269 = vunpack.c.h.b16 %v120
    %v270 = vunpack.c.l.b16 %v121
    %v271 = vunpack.c.h.b16 %v121
    %v272 = vunpack.c.l.b16 %v122
    %v273 = vunpack.c.h.b16 %v122
    %v274 = vunpack.c.l.b16 %v123
    %v275 = vunpack.c.h.b16 %v123
    %v276 = vpack.c.b16 %v268, %v260
    %v277 = vpack.c.b16 %v269, %v261
    %v278 = vpack.c.b16 %v270, %v262
    %v279 = vpack.c.b16 %v271, %v263
    %v280 = vpack.c.b16 %v272, %v264
    %v281 = vpack.c.b16 %v273, %v265
    %v282 = vpack.c.b16 %v274, %v266
    %v283 = vpack.c.b16 %v275, %v267
    %v420 = vunpack.c.l.b16 %v124
    %v421 = vunpack.c.l.b16 %v125
    %v422 = vunpack.c.l.b16 %v126
    %v423 = vunpack.c.l.b16 %v127
    %v424 = vunpack.c.l.b16 %v128
    %v425 = vunpack.c.l.b16 %v129
    %v426 = vunpack.c.l.b16 %v130
    %v427 = vunpack.c.l.b16 %v131
    %v428 = vunpack.c.l.b16 %v132
    %v429 = vunpack.c.l.b16 %v133
    %v430 = vunpack.c.l.b16 %v134
    %v431 = vunpack.c.l.b16 %v135
    %v432 = vunpack.c.l.b16 %v136
    %v433 = vunpack.c.l.b16 %v137
    %v434 = vunpack.c.l.b16 %v138
    %v435 = vunpack.c.l.b16 %v139
    %v436 = vunpack.c.l.b16 %v140
    %v437 = vunpack.c.l.b16 %v141
    %v438 = vunpack.c.l.b16 %v142
    %v439 = vunpack.c.l.b16 %v143
    %v440 = vunpack.c.l.b16 %v144
    %v441 = vunpack.c.l.b16 %v145
    %v442 = vunpack.c.l.b16 %v146
    %v443 = vunpack.c.l.b16 %v147
    %v444 = vunpack.c.l.b16 %v148
    %v445 = vunpack.c.l.b16 %v149
    %v446 = vunpack.c.l.b16 %v150
    %v447 = vunpack.c.l.b16 %v151
    %v448 = vunpack.c.l.b16 %v152
    %v449 = vunpack.c.l.b16 %v153
    %v450 = vunpack.c.l.b16 %v154
    %v451 = vunpack.c.l.b16 %v155
    %v452 = vunpack.c.l.b16 %v156
    %v453 = vunpack.c.l.b16 %v157
    %v454 = vunpack.c.l.b16 %v158
    %v455 = vunpack.c.l.b16 %v159
    %v456 = vunpack.c.l.b16 %v160
    %v457 = vunpack.c.l.b16 %v161
    %v458 = vunpack.c.l.b16 %v162
    %v459 = vunpack.c.l.b16 %v163
    %v460 = vunpack.c.l.b16 %v164
    %v461 = vunpack.c.l.b16 %v165
    %v462 = vunpack.c.l.b16 %v166
    %v463 = vunpack.c.l.b16 %v167
    %v464 = vunpack.c.l.b16 %v168
    %v465 = vunpack.c.l.b16 %v169
    %v466 = vunpack.c.l.b16 %v170
    %v467 = vunpack.c.l.b16 %v171
    %v468 = vunpack.c.l.b16 %v172
    %v469 = vunpack.c.l.b16 %v173
    %v470 = vunpack.c.l.b16 %v174
    %v471 = vunpack.c.l.b16 %v175
    %v472 = vunpack.c.l.b16 %v176
    %v473 = vunpack.c.l.b16 %v177
    %v474 = vunpack.c.l.b16 %v178
    %v475 = vunpack.c.l.b16 %v179
    %v476 = vunpack.c.l.b16 %v180
    %v477 = vunpack.c.l.b16 %v181
    %v478 = vunpack.c.l.b16 %v182
    %v479 = vunpack.c.l.b16 %v183
    %v480 = vunpack.c.l.b16 %v184
    %v481 = vunpack.c.l.b16 %v185
    %v482 = vunpack.c.l.b16 %v186
    %v483 = vunpack.c.l.b16 %v187
    %v484 = vunpack.c.l.b16 %v188
    %v485 = vunpack.c.l.b16 %v189
    %v486 = vunpack.c.l.b16 %v190
    %v487 = vunpack.c.l.b16 %v191
    %v488 = vunpack.c.l.b16 %v192
    %v489 = vunpack.c.l.b16 %v193
    %v490 = vunpack.c.l.b16 %v194
    %v491 = vunpack.c.l.b16 %v195
    %v492 = vunpack.c.l.b16 %v196
    %v493 = vunpack.c.l.b16 %v197
    %v494 = vunpack.c.l.b16 %v198
    %v495 = vunpack.c.l.b16 %v199
    %v496 = vunpack.c.l.b16 %v200
    %v497 = vunpack.c.l.b16 %v201
    %v498 = vunpack.c.l.b16 %v202
    %v499 = vunpack.c.l.b16 %v203
    %v500 = vunpack.c.l.b16 %v204
    %v501 = vunpack.c.l.b16 %v205
    %v502 = vunpack.c.l.b16 %v206
    %v503 = vunpack.c.l.b16 %v207
    %v504 = vunpack.c.l.b16 %v208
    %v505 = vunpack.c.l.b16 %v209
    %v506 = vunpack.c.l.b16 %v210
    %v507 = vunpack.c.l.b16 %v211
    %v508 = vunpack.c.l.b16 %v212
    %v509 = vunpack.c.l.b16 %v213
    %v510 = vunpack.c.l.b16 %v214
    %v511 = vunpack.c.l.b16 %v215
    %v512 = vunpack.c.l.b16 %v216
    %v513 = vunpack.c.l.b16 %v217
    %v514 = vunpack.c.l.b16 %v218
    %v515 = vunpack.c.l.b16 %v219
    %v516 = vunpack.c.l.b16 %v220
    %v517 = vunpack.c.l.b16 %v221
    %v518 = vunpack.c.l.b16 %v222
    %v519 = vunpack.c.l.b16 %v223
    %v520 = vunpack.c.l.b16 %v224
    %v521 = vunpack.c.l.b16 %v225
    %v522 = vunpack.c.l.b16 %v226
    %v523 = vunpack.c.l.b16 %v227
    %v524 = vunpack.c.l.b16 %v228
    %v525 = vunpack.c.l.b16 %v229
    %v526 = vunpack.c.l.b16 %v230
    %v527 = vunpack.c.l.b16 %v231
    %v528 = vunpack.c.l.b16 %v232
    %v529 = vunpack.c.l.b16 %v233
    %v530 = vunpack.c.l.b16 %v234
    %v531 = vunpack.c.l.b16 %v235
    %v532 = vunpack.c.l.b16 %v236
    %v533 = vunpack.c.l.b16 %v237
    %v534 = vunpack.c.l.b16 %v238
    %v535 = vunpack.c.l.b16 %v239
    %v536 = vunpack.c.l.b16 %v240
    %v537 = vunpack.c.l.b16 %v241
    %v538 = vunpack.c.l.b16 %v242
    %v539 = vunpack.c.l.b16 %v243
    %v540 = vunpack.c.l.b16 %v244
    %v541 = vunpack.c.l.b16 %v245
    %v542 = vunpack.c.l.b16 %v246
    %v543 = vunpack.c.l.b16 %v247
    %v544 = vunpack.c.l.b16 %v248
    %v545 = vunpack.c.l.b16 %v249
    %v546 = vunpack.c.l.b16 %v250
    %v547 = vunpack.c.l.b16 %v251
    %v548 = vpack.c.b16 %v421, %v420
    %v549 = vpack.c.b16 %v423, %v422
    %v550 = vpack.c.b16 %v425, %v424
    %v551 = vpack.c.b16 %v427, %v426
    %v552 = vpack.c.b16 %v429, %v428
    %v553 = vpack.c.b16 %v431, %v430
    %v554 = vpack.c.b16 %v433, %v432
    %v555 = vpack.c.b16 %v435, %v434
    %v556 = vpack.c.b16 %v437, %v436
    %v557 = vpack.c.b16 %v439, %v438
    %v558 = vpack.c.b16 %v441, %v440
    %v559 = vpack.c.b16 %v443, %v442
    %v560 = vpack.c.b16 %v445, %v444
    %v561 = vpack.c.b16 %v447, %v446
    %v562 = vpack.c.b16 %v449, %v448
    %v563 = vpack.c.b16 %v451, %v450
    %v564 = vpack.c.b16 %v453, %v452
    %v565 = vpack.c.b16 %v455, %v454
    %v566 = vpack.c.b16 %v457, %v456
    %v567 = vpack.c.b16 %v459, %v458
    %v568 = vpack.c.b16 %v461, %v460
    %v569 = vpack.c.b16 %v463, %v462
    %v570 = vpack.c.b16 %v465, %v464
    %v571 = vpack.c.b16 %v467, %v466
    %v572 = vpack.c.b16 %v469, %v468
    %v573 = vpack.c.b16 %v471, %v470
    %v574 = vpack.c.b16 %v473, %v472
    %v575 = vpack.c.b16 %v475, %v474
    %v576 = vpack.c.b16 %v477, %v476
    %v577 = vpack.c.b16 %v479, %v478
    %v578 = vpack.c.b16 %v481, %v480
    %v579 = vpack.c.b16 %v483, %v482
    %v580 = vpack.c.b16 %v485, %v484
    %v581 = vpack.c.b16 %v487, %v486
    %v582 = vpack.c.b16 %v489, %v488
    %v583 = vpack.c.b16 %v491, %v490
    %v584 = vpack.c.b16 %v493, %v492
    %v585 = vpack.c.b16 %v495, %v494
    %v586 = vpack.c.b16 %v497, %v496
    %v587 = vpack.c.b16 %v499, %v498
    %v588 = vpack.c.b16 %v501, %v500
    %v589 = vpack.c.b16 %v503, %v502
    %v590 = vpack.c.b16 %v505, %v504
    %v591 = vpack.c.b16 %v507, %v506
    %v592 = vpack.c.b16 %v509, %v508
    %v593 = vpack.c.b16 %v511, %v510
    %v594 = vpack.c.b16 %v513, %v512
    %v595 = vpack.c.b16 %v515, %v514
    %v596 = vpack.c.b16 %v517, %v516
    %v597 = vpack.c.b16 %v519, %v518
    %v598 = vpack.c.b16 %v521, %v520
    %v599 = vpack.c.b16 %v523, %v522
    %v600 = vpack.c.b16 %v525, %v524
    %v601 = vpack.c.b16 %v527, %v526
    %v602 = vpack.c.b16 %v529, %v528
    %v603 = vpack.c.b16 %v531, %v530
    %v604 = vpack.c.b16 %v533, %v532
    %v605 = vpack.c.b16 %v535, %v534
    %v606 = vpack.c.b16 %v537, %v536
    %v607 = vpack.c.b16 %v539, %v538
    %v608 = vpack.c.b16 %v541, %v540
    %v609 = vpack.c.b16 %v543, %v542
    %v610 = vpack.c.b16 %v545, %v544
    %v611 = vpack.c.b16 %v547, %v546
    %676 = vmatprep.subr.bf16.mxu0 0
    %677 = vmatpush1.bf16.msra.mxu0 %v548
    %678 = vmatprep.subr.bf16.mxu0 0
    %679 = vmatpush1.bf16.msra.mxu0 %v549
    %680 = vmatprep.subr.bf16.mxu0 0
    %681 = vmatpush1.bf16.msra.mxu0 %v550
    %682 = vmatprep.subr.bf16.mxu0 0
    %683 = vmatpush1.bf16.msra.mxu0 %v551
    %684 = vmatprep.subr.bf16.mxu0 0
    %685 = vmatpush1.bf16.msra.mxu0 %v552
    %686 = vmatprep.subr.bf16.mxu0 0
    %687 = vmatpush1.bf16.msra.mxu0 %v553
    %688 = vmatprep.subr.bf16.mxu0 0
    %689 = vmatpush1.bf16.msra.mxu0 %v554
    %690 = vmatprep.subr.bf16.mxu0 0
    %691 = vmatpush1.bf16.msra.mxu0 %v555
    %692 = vmatprep.subr.bf16.mxu0 0
    %693 = vmatpush1.bf16.msra.mxu0 %v556
    %694 = vmatprep.subr.bf16.mxu0 0
    %695 = vmatpush1.bf16.msra.mxu0 %v557
    %696 = vmatprep.subr.bf16.mxu0 0
    %697 = vmatpush1.bf16.msra.mxu0 %v558
    %698 = vmatprep.subr.bf16.mxu0 0
    %699 = vmatpush1.bf16.msra.mxu0 %v559
    %700 = vmatprep.subr.bf16.mxu0 0
    %701 = vmatpush1.bf16.msra.mxu0 %v560
    %702 = vmatprep.subr.bf16.mxu0 0
    %703 = vmatpush1.bf16.msra.mxu0 %v561
    %704 = vmatprep.subr.bf16.mxu0 0
    %705 = vmatpush1.bf16.msra.mxu0 %v562
    %706 = vmatprep.subr.bf16.mxu0 0
    %707 = vmatpush1.bf16.msra.mxu0 %v563
    %708 = vmatprep.mubr.bf16.mxu0 %v277
    %709 = vmatmul.mubr.bf16.gmra.mrb[0].mxu0 %v276
    %v710 = vpop.f32.mrb[0].mxu0
    %v711 = vadd.f32 0.0, %v710
    %v712 = vpop.f32.mrb[0].mxu0
    %v713 = vpop.f32.mrb[0].mxu0
    %v714 = vadd.f32 0.0, %v713
    %v715 = vpop.f32.mrb[0].mxu0
    %716 = vdwg.mxu0
    %717 = vmatprep.subr.bf16.mxu0 0
    %718 = vmatpush1.bf16.msra.mxu0 %v564
    %719 = vmatprep.subr.bf16.mxu0 0
    %720 = vmatpush1.bf16.msra.mxu0 %v565
    %721 = vmatprep.subr.bf16.mxu0 0
    %722 = vmatpush1.bf16.msra.mxu0 %v566
    %723 = vmatprep.subr.bf16.mxu0 0
    %724 = vmatpush1.bf16.msra.mxu0 %v567
    %725 = vmatprep.subr.bf16.mxu0 0
    %726 = vmatpush1.bf16.msra.mxu0 %v568
    %727 = vmatprep.subr.bf16.mxu0 0
    %728 = vmatpush1.bf16.msra.mxu0 %v569
    %729 = vmatprep.subr.bf16.mxu0 0
    %730 = vmatpush1.bf16.msra.mxu0 %v570
    %731 = vmatprep.subr.bf16.mxu0 0
    %732 = vmatpush1.bf16.msra.mxu0 %v571
    %733 = vmatprep.subr.bf16.mxu0 0
    %734 = vmatpush1.bf16.msra.mxu0 %v572
    %735 = vmatprep.subr.bf16.mxu0 0
    %736 = vmatpush1.bf16.msra.mxu0 %v573
    %737 = vmatprep.subr.bf16.mxu0 0
    %738 = vmatpush1.bf16.msra.mxu0 %v574
    %739 = vmatprep.subr.bf16.mxu0 0
    %740 = vmatpush1.bf16.msra.mxu0 %v575
    %741 = vmatprep.subr.bf16.mxu0 0
    %742 = vmatpush1.bf16.msra.mxu0 %v576
    %743 = vmatprep.subr.bf16.mxu0 0
    %744 = vmatpush1.bf16.msra.mxu0 %v577
    %745 = vmatprep.subr.bf16.mxu0 0
    %746 = vmatpush1.bf16.msra.mxu0 %v578
    %747 = vmatprep.subr.bf16.mxu0 0
    %748 = vmatpush1.bf16.msra.mxu0 %v579
    %749 = vmatprep.mubr.bf16.mxu0 %v279
    %750 = vmatmul.mubr.bf16.gmra.mrb[0].mxu0 %v278
    %v751 = vpop.f32.mrb[0].mxu0
    %v752 = vadd.f32 %v711, %v751
    %v753 = vpop.f32.mrb[0].mxu0
    %v754 = vpop.f32.mrb[0].mxu0
    %v755 = vadd.f32 %v714, %v754
    %v756 = vpop.f32.mrb[0].mxu0
    %757 = vdwg.mxu0
    %758 = vmatprep.subr.bf16.mxu0 0
    %759 = vmatpush1.bf16.msra.mxu0 %v580
    %760 = vmatprep.subr.bf16.mxu0 0
    %761 = vmatpush1.bf16.msra.mxu0 %v581
    %762 = vmatprep.subr.bf16.mxu0 0
    %763 = vmatpush1.bf16.msra.mxu0 %v582
    %764 = vmatprep.subr.bf16.mxu0 0
    %765 = vmatpush1.bf16.msra.mxu0 %v583
    %766 = vmatprep.subr.bf16.mxu0 0
    %767 = vmatpush1.bf16.msra.mxu0 %v584
    %768 = vmatprep.subr.bf16.mxu0 0
    %769 = vmatpush1.bf16.msra.mxu0 %v585
    %770 = vmatprep.subr.bf16.mxu0 0
    %771 = vmatpush1.bf16.msra.mxu0 %v586
    %772 = vmatprep.subr.bf16.mxu0 0
    %773 = vmatpush1.bf16.msra.mxu0 %v587
    %774 = vmatprep.subr.bf16.mxu0 0
    %775 = vmatpush1.bf16.msra.mxu0 %v588
    %776 = vmatprep.subr.bf16.mxu0 0
    %777 = vmatpush1.bf16.msra.mxu0 %v589
    %778 = vmatprep.subr.bf16.mxu0 0
    %779 = vmatpush1.bf16.msra.mxu0 %v590
    %780 = vmatprep.subr.bf16.mxu0 0
    %781 = vmatpush1.bf16.msra.mxu0 %v591
    %782 = vmatprep.subr.bf16.mxu0 0
    %783 = vmatpush1.bf16.msra.mxu0 %v592
    %784 = vmatprep.subr.bf16.mxu0 0
    %785 = vmatpush1.bf16.msra.mxu0 %v593
    %786 = vmatprep.subr.bf16.mxu0 0
    %787 = vmatpush1.bf16.msra.mxu0 %v594
    %788 = vmatprep.subr.bf16.mxu0 0
    %789 = vmatpush1.bf16.msra.mxu0 %v595
    %790 = vmatprep.mubr.bf16.mxu0 %v281
    %791 = vmatmul.mubr.bf16.gmra.mrb[0].mxu0 %v280
    %v792 = vpop.f32.mrb[0].mxu0
    %v793 = vadd.f32 %v752, %v792
    %v794 = vpop.f32.mrb[0].mxu0
    %v795 = vpop.f32.mrb[0].mxu0
    %v796 = vadd.f32 %v755, %v795
    %v797 = vpop.f32.mrb[0].mxu0
    %798 = vdwg.mxu0
    %799 = vmatprep.subr.bf16.mxu0 0
    %800 = vmatpush1.bf16.msra.mxu0 %v596
    %801 = vmatprep.subr.bf16.mxu0 0
    %802 = vmatpush1.bf16.msra.mxu0 %v597
    %803 = vmatprep.subr.bf16.mxu0 0
    %804 = vmatpush1.bf16.msra.mxu0 %v598
    %805 = vmatprep.subr.bf16.mxu0 0
    %806 = vmatpush1.bf16.msra.mxu0 %v599
    %807 = vmatprep.subr.bf16.mxu0 0
    %808 = vmatpush1.bf16.msra.mxu0 %v600
    %809 = vmatprep.subr.bf16.mxu0 0
    %810 = vmatpush1.bf16.msra.mxu0 %v601
    %811 = vmatprep.subr.bf16.mxu0 0
    %812 = vmatpush1.bf16.msra.mxu0 %v602
    %813 = vmatprep.subr.bf16.mxu0 0
    %814 = vmatpush1.bf16.msra.mxu0 %v603
    %815 = vmatprep.subr.bf16.mxu0 0
    %816 = vmatpush1.bf16.msra.mxu0 %v604
    %817 = vmatprep.subr.bf16.mxu0 0
    %818 = vmatpush1.bf16.msra.mxu0 %v605
    %819 = vmatprep.subr.bf16.mxu0 0
    %820 = vmatpush1.bf16.msra.mxu0 %v606
    %821 = vmatprep.subr.bf16.mxu0 0
    %822 = vmatpush1.bf16.msra.mxu0 %v607
    %823 = vmatprep.subr.bf16.mxu0 0
    %824 = vmatpush1.bf16.msra.mxu0 %v608
    %825 = vmatprep.subr.bf16.mxu0 0
    %826 = vmatpush1.bf16.msra.mxu0 %v609
    %827 = vmatprep.subr.bf16.mxu0 0
    %828 = vmatpush1.bf16.msra.mxu0 %v610
    %829 = vmatprep.subr.bf16.mxu0 0
    %830 = vmatpush1.bf16.msra.mxu0 %v611
    %831 = vmatprep.mubr.bf16.mxu0 %v283
    %832 = vmatmul.mubr.bf16.gmra.mrb[0].mxu0 %v282
    %v833 = vpop.f32.mrb[0].mxu0
    %v834 = vadd.f32 %v793, %v833
    %v835 = vpop.f32.mrb[0].mxu0
    %v836 = vpop.f32.mrb[0].mxu0
    %v837 = vadd.f32 %v796, %v836
    %v838 = vpop.f32.mrb[0].mxu0
    %839 = vdwg.mxu0
    %v840 = vadd.f32 %v114, %v834
    %v841 = vadd.f32 %v115, %v837
    %842 = vst [vmem:[#allocation2] sm:$0xff] %v840
    %843 = vst [vmem:[#allocation2 + $0x8] sm:$0xff] %v841
    // Predicated region
    $region70: #{tpu_custom_call.1} parent=1 // pred_check
      %p844 = pneg %p108
    $region71: #{tpu_custom_call.1} parent=1 // pred_check_branch
      %846 = sbr.rel (%p844) target = $region73
    $region72: #{tpu_custom_call.1} parent=1 // pred_region
      %v847 = vld [vmem:[%s0] sm:$0xf]
      %v848 = vld [vmem:[%s0 + $0x4] sm:$0xf]
      %v849 = vld [vmem:[%s2] sm:$0xf]
      %v850 = vld [vmem:[%s3] sm:$0x1]
      %v852 = vlaneseq
      %v853 = vshrl.u32 %v852, 7
      %v854 = vsub.s32 0, %v853
      %v855 = vrot.slane %v850, %v854
      %v859 = vunpack.c.l.b16 %v847
      %v860 = vunpack.c.l.b16 %v848
      %v861 = vpack.c.b16 %v860, %v859
      %vm862 = vcmask 64512
      %v864 = vsel %vm862, %v861, 0
      %vm866 = vcmask 1043456
      %v868 = vsel %vm866, %v849, 0
      %870 = vmatprep.subr.bf16.mxu0 0
      %871 = vmatpush1.bf16.msra.mxu0 %v868
      %872 = vmatprep.subr.bf16.mxu0 0
      %873 = vmatpush1.bf16.msra.mxu0 0
      %874 = vmatprep.subr.bf16.mxu0 0
      %875 = vmatpush1.bf16.msra.mxu0 0
      %876 = vmatprep.subr.bf16.mxu0 0
      %877 = vmatpush1.bf16.msra.mxu0 0
      %878 = vmatprep.subr.bf16.mxu0 0
      %879 = vmatpush1.bf16.msra.mxu0 0
      %880 = vmatprep.subr.bf16.mxu0 0
      %881 = vmatpush1.bf16.msra.mxu0 0
      %882 = vmatprep.subr.bf16.mxu0 0
      %883 = vmatpush1.bf16.msra.mxu0 0
      %884 = vmatprep.subr.bf16.mxu0 0
      %885 = vmatpush1.bf16.msra.mxu0 0
      %886 = vmatprep.subr.bf16.mxu0 0
      %887 = vmatpush1.bf16.msra.mxu0 0
      %888 = vmatprep.subr.bf16.mxu0 0
      %889 = vmatpush1.bf16.msra.mxu0 0
      %890 = vmatprep.subr.bf16.mxu0 0
      %891 = vmatpush1.bf16.msra.mxu0 0
      %892 = vmatprep.subr.bf16.mxu0 0
      %893 = vmatpush1.bf16.msra.mxu0 0
      %894 = vmatprep.subr.bf16.mxu0 0
      %895 = vmatpush1.bf16.msra.mxu0 0
      %896 = vmatprep.subr.bf16.mxu0 0
      %897 = vmatpush1.bf16.msra.mxu0 0
      %898 = vmatprep.subr.bf16.mxu0 0
      %899 = vmatpush1.bf16.msra.mxu0 0
      %900 = vmatprep.subr.bf16.mxu0 0
      %901 = vmatpush1.bf16.msra.mxu0 0
      %902 = vmatprep.mubr.bf16.mxu0 0
      %903 = vmatmul.mubr.bf16.gmra.mrb[0].mxu0 %v864
      %v904 = vpop.f32.mrb[0].mxu0
      %v905 = vadd.f32 %v855, %v904
      %v906 = vpop.f32.mrb[0].mxu0
      %v907 = vpop.f32.mrb[0].mxu0
      %v908 = vadd.f32 %v855, %v907
      %v909 = vpop.f32.mrb[0].mxu0
      %910 = vdwg.mxu0
      %v911 = vmax.f32 %v905, 0.0
      %v912 = vmax.f32 %v908, 0.0
      %v913 = vld [vmem:[#allocation2] sm:$0xff]
      %v914 = vld [vmem:[#allocation2 + $0x8] sm:$0xff]
      %v915 = vld [vmem:[%s5] sm:$0x1]
      %v917 = vlaneseq
      %v918 = vshrl.u32 %v917, 7
      %v919 = vsub.s32 0, %v918
      %v920 = vrot.slane %v915, %v919
      %v922 = vadd.f32 %v913, %v920
      %v923 = vadd.f32 %v914, %v920
      %v924 = vmax.f32 %v922, 0.0
      %v925 = vmax.f32 %v923, 0.0
      %v926 = vpack.c.bf16 %v912, %v911
      %v927 = vld [vmem:[#allocation8] sm:$0xf]
      %v928 = vld [vmem:[#allocation8 + $0x4] sm:$0xf]
      %v929 = vld [vmem:[#allocation8 + $0x8] sm:$0xf]
      %v930 = vld [vmem:[#allocation8 + $0xc] sm:$0xf]
      %v931 = vld [vmem:[#allocation8 + $0x10] sm:$0xf]
      %v932 = vld [vmem:[#allocation8 + $0x14] sm:$0xf]
      %v933 = vld [vmem:[#allocation8 + $0x18] sm:$0xf]
      %v934 = vld [vmem:[#allocation8 + $0x1c] sm:$0xf]
      %v935 = vld [vmem:[#allocation8 + $0x20] sm:$0xf]
      %v936 = vld [vmem:[#allocation8 + $0x24] sm:$0xf]
      %v937 = vld [vmem:[#allocation8 + $0x28] sm:$0xf]
      %v938 = vld [vmem:[#allocation8 + $0x2c] sm:$0xf]
      %v939 = vld [vmem:[#allocation8 + $0x30] sm:$0xf]
      %v940 = vld [vmem:[#allocation8 + $0x34] sm:$0xf]
      %v941 = vld [vmem:[#allocation8 + $0x38] sm:$0xf]
      %v942 = vld [vmem:[#allocation8 + $0x3c] sm:$0xf]
      %v943 = vpack.c.bf16 %v925, %v924
      %v944 = vld [vmem:[#allocation9] sm:$0xf]
      %v945 = vld [vmem:[#allocation9 + $0x4] sm:$0xf]
      %v946 = vld [vmem:[#allocation9 + $0x8] sm:$0xf]
      %v947 = vld [vmem:[#allocation9 + $0xc] sm:$0xf]
      %v948 = vld [vmem:[#allocation9 + $0x10] sm:$0xf]
      %v949 = vld [vmem:[#allocation9 + $0x14] sm:$0xf]
      %v950 = vld [vmem:[#allocation9 + $0x18] sm:$0xf]
      %v951 = vld [vmem:[#allocation9 + $0x1c] sm:$0xf]
      %v952 = vld [vmem:[#allocation9 + $0x20] sm:$0xf]
      %v953 = vld [vmem:[#allocation9 + $0x24] sm:$0xf]
      %v954 = vld [vmem:[#allocation9 + $0x28] sm:$0xf]
      %v955 = vld [vmem:[#allocation9 + $0x2c] sm:$0xf]
      %v956 = vld [vmem:[#allocation9 + $0x30] sm:$0xf]
      %v957 = vld [vmem:[#allocation9 + $0x34] sm:$0xf]
      %v958 = vld [vmem:[#allocation9 + $0x38] sm:$0xf]
      %v959 = vld [vmem:[#allocation9 + $0x3c] sm:$0xf]
      %v976 = vunpack.c.l.b16 %v944
      %v977 = vunpack.c.l.b16 %v945
      %v978 = vunpack.c.l.b16 %v946
      %v979 = vunpack.c.l.b16 %v947
      %v980 = vunpack.c.l.b16 %v948
      %v981 = vunpack.c.l.b16 %v949
      %v982 = vunpack.c.l.b16 %v950
      %v983 = vunpack.c.l.b16 %v951
      %v984 = vunpack.c.l.b16 %v952
      %v985 = vunpack.c.l.b16 %v953
      %v986 = vunpack.c.l.b16 %v954
      %v987 = vunpack.c.l.b16 %v955
      %v988 = vunpack.c.l.b16 %v956
      %v989 = vunpack.c.l.b16 %v957
      %v990 = vunpack.c.l.b16 %v958
      %v991 = vunpack.c.l.b16 %v959
      %v992 = vpack.c.b16 %v977, %v976
      %v993 = vpack.c.b16 %v979, %v978
      %v994 = vpack.c.b16 %v981, %v980
      %v995 = vpack.c.b16 %v983, %v982
      %v996 = vpack.c.b16 %v985, %v984
      %v997 = vpack.c.b16 %v987, %v986
      %v998 = vpack.c.b16 %v989, %v988
      %v999 = vpack.c.b16 %v991, %v990
      %1008 = vmatprep.subr.bf16.mxu0 0
      %1009 = vmatpush1.bf16.msra.mxu0 %v992
      %1010 = vmatprep.subr.bf16.mxu0 0
      %1011 = vmatpush1.bf16.msra.mxu0 %v993
      %1012 = vmatprep.subr.bf16.mxu0 0
      %1013 = vmatpush1.bf16.msra.mxu0 %v994
      %1014 = vmatprep.subr.bf16.mxu0 0
      %1015 = vmatpush1.bf16.msra.mxu0 %v995
      %1016 = vmatprep.subr.bf16.mxu0 0
      %1017 = vmatpush1.bf16.msra.mxu0 %v996
      %1018 = vmatprep.subr.bf16.mxu0 0
      %1019 = vmatpush1.bf16.msra.mxu0 %v997
      %1020 = vmatprep.subr.bf16.mxu0 0
      %1021 = vmatpush1.bf16.msra.mxu0 %v998
      %1022 = vmatprep.subr.bf16.mxu0 0
      %1023 = vmatpush1.bf16.msra.mxu0 %v999
      %1024 = vmatprep.subr.bf16.mxu0 0
      %1025 = vmatpush1.bf16.msra.mxu0 0
      %1026 = vmatprep.subr.bf16.mxu0 0
      %1027 = vmatpush1.bf16.msra.mxu0 0
      %1028 = vmatprep.subr.bf16.mxu0 0
      %1029 = vmatpush1.bf16.msra.mxu0 0
      %1030 = vmatprep.subr.bf16.mxu0 0
      %1031 = vmatpush1.bf16.msra.mxu0 0
      %1032 = vmatprep.subr.bf16.mxu0 0
      %1033 = vmatpush1.bf16.msra.mxu0 0
      %1034 = vmatprep.subr.bf16.mxu0 0
      %1035 = vmatpush1.bf16.msra.mxu0 0
      %1036 = vmatprep.subr.bf16.mxu0 0
      %1037 = vmatpush1.bf16.msra.mxu0 0
      %1038 = vmatprep.subr.bf16.mxu0 0
      %1039 = vmatpush1.bf16.msra.mxu0 0
      %1040 = vmatprep.mubr.bf16.mxu0 0
      %1041 = vmatmul.mubr.bf16.gmra.mrb[0].mxu0 %v943
      %v1042 = vpop.f32.mrb[0].mxu0
      %v1043 = vadd.f32 0.0, %v1042
      %v1044 = vpop.f32.mrb[0].mxu0
      %v1045 = vpop.f32.mrb[0].mxu0
      %v1046 = vadd.f32 0.0, %v1045
      %v1047 = vpop.f32.mrb[0].mxu0
      %1048 = vdwg.mxu0
      %v1065 = vunpack.c.l.b16 %v927
      %v1066 = vunpack.c.l.b16 %v928
      %v1067 = vunpack.c.l.b16 %v929
      %v1068 = vunpack.c.l.b16 %v930
      %v1069 = vunpack.c.l.b16 %v931
      %v1070 = vunpack.c.l.b16 %v932
      %v1071 = vunpack.c.l.b16 %v933
      %v1072 = vunpack.c.l.b16 %v934
      %v1073 = vunpack.c.l.b16 %v935
      %v1074 = vunpack.c.l.b16 %v936
      %v1075 = vunpack.c.l.b16 %v937
      %v1076 = vunpack.c.l.b16 %v938
      %v1077 = vunpack.c.l.b16 %v939
      %v1078 = vunpack.c.l.b16 %v940
      %v1079 = vunpack.c.l.b16 %v941
      %v1080 = vunpack.c.l.b16 %v942
      %v1081 = vpack.c.b16 %v1066, %v1065
      %v1082 = vpack.c.b16 %v1068, %v1067
      %v1083 = vpack.c.b16 %v1070, %v1069
      %v1084 = vpack.c.b16 %v1072, %v1071
      %v1085 = vpack.c.b16 %v1074, %v1073
      %v1086 = vpack.c.b16 %v1076, %v1075
      %v1087 = vpack.c.b16 %v1078, %v1077
      %v1088 = vpack.c.b16 %v1080, %v1079
      %1097 = vmatprep.subr.bf16.mxu0 0
      %1098 = vmatpush1.bf16.msra.mxu0 %v1081
      %1099 = vmatprep.subr.bf16.mxu0 0
      %1100 = vmatpush1.bf16.msra.mxu0 %v1082
      %1101 = vmatprep.subr.bf16.mxu0 0
      %1102 = vmatpush1.bf16.msra.mxu0 %v1083
      %1103 = vmatprep.subr.bf16.mxu0 0
      %1104 = vmatpush1.bf16.msra.mxu0 %v1084
      %1105 = vmatprep.subr.bf16.mxu0 0
      %1106 = vmatpush1.bf16.msra.mxu0 %v1085
      %1107 = vmatprep.subr.bf16.mxu0 0
      %1108 = vmatpush1.bf16.msra.mxu0 %v1086
      %1109 = vmatprep.subr.bf16.mxu0 0
      %1110 = vmatpush1.bf16.msra.mxu0 %v1087
      %1111 = vmatprep.subr.bf16.mxu0 0
      %1112 = vmatpush1.bf16.msra.mxu0 %v1088
      %1113 = vmatprep.subr.bf16.mxu0 0
      %1114 = vmatpush1.bf16.msra.mxu0 0
      %1115 = vmatprep.subr.bf16.mxu0 0
      %1116 = vmatpush1.bf16.msra.mxu0 0
      %1117 = vmatprep.subr.bf16.mxu0 0
      %1118 = vmatpush1.bf16.msra.mxu0 0
      %1119 = vmatprep.subr.bf16.mxu0 0
      %1120 = vmatpush1.bf16.msra.mxu0 0
      %1121 = vmatprep.subr.bf16.mxu0 0
      %1122 = vmatpush1.bf16.msra.mxu0 0
      %1123 = vmatprep.subr.bf16.mxu0 0
      %1124 = vmatpush1.bf16.msra.mxu0 0
      %1125 = vmatprep.subr.bf16.mxu0 0
      %1126 = vmatpush1.bf16.msra.mxu0 0
      %1127 = vmatprep.subr.bf16.mxu0 0
      %1128 = vmatpush1.bf16.msra.mxu0 0
      %1129 = vmatprep.mubr.bf16.mxu0 0
      %1130 = vmatmul.mubr.bf16.gmra.mrb[0].mxu0 %v926
      %v1131 = vpop.f32.mrb[0].mxu0
      %v1132 = vadd.f32 %v1043, %v1131
      %v1133 = vpop.f32.mrb[0].mxu0
      %v1134 = vpop.f32.mrb[0].mxu0
      %v1135 = vadd.f32 %v1046, %v1134
      %v1136 = vpop.f32.mrb[0].mxu0
      %1137 = vdwg.mxu0
      %v1138 = vld [vmem:[%s8] sm:$0x1]
      %v1140 = vlaneseq
      %v1141 = vshrl.u32 %v1140, 7
      %v1142 = vsub.s32 0, %v1141
      %v1143 = vrot.slane %v1138, %v1142
      %v1145 = vadd.f32 %v1132, %v1143
      %v1146 = vadd.f32 %v1135, %v1143
      %v1147 = vmax.f32 %v1145, 0.0
      %v1148 = vmax.f32 %v1146, 0.0
      %v1149 = vpack.c.bf16 %v1148, %v1147
      %v1150 = vld [vmem:[#allocation11] sm:$0xf]
      %v1151 = vld [vmem:[#allocation11 + $0x4] sm:$0xf]
      %v1152 = vld [vmem:[#allocation11 + $0x8] sm:$0xf]
      %v1153 = vld [vmem:[#allocation11 + $0xc] sm:$0xf]
      %v1154 = vld [vmem:[#allocation11 + $0x10] sm:$0xf]
      %v1155 = vld [vmem:[#allocation11 + $0x14] sm:$0xf]
      %v1156 = vld [vmem:[#allocation11 + $0x18] sm:$0xf]
      %v1157 = vld [vmem:[#allocation11 + $0x1c] sm:$0xf]
      %v1158 = vld [vmem:[#allocation11 + $0x20] sm:$0xf]
      %v1159 = vld [vmem:[#allocation11 + $0x24] sm:$0xf]
      %v1160 = vld [vmem:[#allocation11 + $0x28] sm:$0xf]
      %v1161 = vld [vmem:[#allocation11 + $0x2c] sm:$0xf]
      %v1162 = vld [vmem:[#allocation11 + $0x30] sm:$0xf]
      %v1163 = vld [vmem:[#allocation11 + $0x34] sm:$0xf]
      %v1164 = vld [vmem:[#allocation11 + $0x38] sm:$0xf]
      %v1165 = vld [vmem:[#allocation11 + $0x3c] sm:$0xf]
      %v1166 = vld [vmem:[%s10] sm:$0x1]
      %v1168 = vlaneseq
      %v1169 = vshrl.u32 %v1168, 7
      %v1170 = vsub.s32 0, %v1169
      %v1171 = vrot.slane %v1166, %v1170
      %v1189 = vunpack.c.l.b16 %v1150
      %v1190 = vunpack.c.l.b16 %v1151
      %v1191 = vunpack.c.l.b16 %v1152
      %v1192 = vunpack.c.l.b16 %v1153
      %v1193 = vunpack.c.l.b16 %v1154
      %v1194 = vunpack.c.l.b16 %v1155
      %v1195 = vunpack.c.l.b16 %v1156
      %v1196 = vunpack.c.l.b16 %v1157
      %v1197 = vunpack.c.l.b16 %v1158
      %v1198 = vunpack.c.l.b16 %v1159
      %v1199 = vunpack.c.l.b16 %v1160
      %v1200 = vunpack.c.l.b16 %v1161
      %v1201 = vunpack.c.l.b16 %v1162
      %v1202 = vunpack.c.l.b16 %v1163
      %v1203 = vunpack.c.l.b16 %v1164
      %v1204 = vunpack.c.l.b16 %v1165
      %v1205 = vpack.c.b16 %v1190, %v1189
      %v1206 = vpack.c.b16 %v1192, %v1191
      %v1207 = vpack.c.b16 %v1194, %v1193
      %v1208 = vpack.c.b16 %v1196, %v1195
      %v1209 = vpack.c.b16 %v1198, %v1197
      %v1210 = vpack.c.b16 %v1200, %v1199
      %v1211 = vpack.c.b16 %v1202, %v1201
      %v1212 = vpack.c.b16 %v1204, %v1203
      %1221 = vmatprep.subr.bf16.mxu0 0
      %1222 = vmatpush1.bf16.msra.mxu0 %v1205
      %1223 = vmatprep.subr.bf16.mxu0 0
      %1224 = vmatpush1.bf16.msra.mxu0 %v1206
      %1225 = vmatprep.subr.bf16.mxu0 0
      %1226 = vmatpush1.bf16.msra.mxu0 %v1207
      %1227 = vmatprep.subr.bf16.mxu0 0
      %1228 = vmatpush1.bf16.msra.mxu0 %v1208
      %1229 = vmatprep.subr.bf16.mxu0 0
      %1230 = vmatpush1.bf16.msra.mxu0 %v1209
      %1231 = vmatprep.subr.bf16.mxu0 0
      %1232 = vmatpush1.bf16.msra.mxu0 %v1210
      %1233 = vmatprep.subr.bf16.mxu0 0
      %1234 = vmatpush1.bf16.msra.mxu0 %v1211
      %1235 = vmatprep.subr.bf16.mxu0 0
      %1236 = vmatpush1.bf16.msra.mxu0 %v1212
      %1237 = vmatprep.subr.bf16.mxu0 0
      %1238 = vmatpush1.bf16.msra.mxu0 0
      %1239 = vmatprep.subr.bf16.mxu0 0
      %1240 = vmatpush1.bf16.msra.mxu0 0
      %1241 = vmatprep.subr.bf16.mxu0 0
      %1242 = vmatpush1.bf16.msra.mxu0 0
      %1243 = vmatprep.subr.bf16.mxu0 0
      %1244 = vmatpush1.bf16.msra.mxu0 0
      %1245 = vmatprep.subr.bf16.mxu0 0
      %1246 = vmatpush1.bf16.msra.mxu0 0
      %1247 = vmatprep.subr.bf16.mxu0 0
      %1248 = vmatpush1.bf16.msra.mxu0 0
      %1249 = vmatprep.subr.bf16.mxu0 0
      %1250 = vmatpush1.bf16.msra.mxu0 0
      %1251 = vmatprep.subr.bf16.mxu0 0
      %1252 = vmatpush1.bf16.msra.mxu0 0
      %1253 = vmatprep.mubr.bf16.mxu0 0
      %1254 = vmatmul.mubr.bf16.gmra.mrb[0].mxu0 %v1149
      %v1255 = vpop.f32.mrb[0].mxu0
      %v1256 = vadd.f32 %v1171, %v1255
      %v1257 = vpop.f32.mrb[0].mxu0
      %v1258 = vpop.f32.mrb[0].mxu0
      %v1259 = vadd.f32 %v1171, %v1258
      %v1260 = vpop.f32.mrb[0].mxu0
      %1261 = vdwg.mxu0
      %v1262 = vlaneseq
      %v1263 = vand.u32 %v1262, 127
      %vm1264 = vcmp.lt.s32.totalorder %v1263, 2
      %v1265 = vsel %vm1264, %v1256, -1e+30
      %v1266 = vsel %vm1264, %v1259, -1e+30
      %1267 = vmax.xlane.f32.xlu0 %v1265
      %v1268 = vpop.xlane.xlu0 %1267
      %1269 = vmax.xlane.f32.xlu0 %v1266
      %v1270 = vpop.xlane.xlu0 %1269
      %v1271 = vsub.f32 %v1265, %v1268
      %v1272 = vsub.f32 %v1266, %v1270
      %v1273 = vmul.f32 %v1271, 1.442695
      %v1274 = vpow.pop %v1273
      %v1275 = vmul.f32 %v1272, 1.442695
      %v1276 = vpow.pop %v1275
      %1277 = vadd.xlane.f32.xlu0 %v1274
      %v1278 = vpop.xlane.xlu0 %1277
      %1279 = vadd.xlane.f32.xlu0 %v1276
      %v1280 = vpop.xlane.xlu0 %1279
      %v1281 = vrcp.pop %v1278
      %v1282 = vrcp.pop %v1280
      %v1283 = vmul.f32 %v1274, %v1281
      %v1284 = vmul.f32 %v1276, %v1282
      %1285 = vst [vmem:[#allocation12] sm:$0xff] %v1283
      %1286 = vst [vmem:[#allocation12 + $0x8] sm:$0xff] %v1284
    $region73: #{tpu_custom_call.1} parent=1 // pred_fallthru
      _
    // Predicated region
    $region74: #{tpu_custom_call.1} parent=1 // pred_check
      _
    $region75: #{tpu_custom_call.1} parent=1 // pred_check_branch
      %1288 = sbr.rel (0) target = $region77
    $region76: #{tpu_custom_call.1} parent=1 // pred_region
      %s1290 = ssub.s32 256, 256
      %1291 = vsyncadd [#allocation5], %s1290
      %s1292 = sshll.u32 [#allocation12], 4
      %s1293 = int_to_ptr.vmem [resolvable:$true] %s1292
      %1298 = dma.vmem_to_hbm [thread:$0]  %s1293, 256, %s11, [#allocation5], 128, 128, 8
    $region77: #{tpu_custom_call.1} parent=1 // pred_fallthru
      _
    // Predicated region
    $region78: #{tpu_custom_call.1} parent=1 // pred_check
      _
    $region79: #{tpu_custom_call.1} parent=1 // pred_check_branch
      %1300 = sbr.rel (0) target = $region81
    $region80: #{tpu_custom_call.1} parent=1 // pred_region
      %1301 = dma.done [#allocation5], 256
    $region81: #{tpu_custom_call.1} parent=1 // pred_fallthru
      _
    %1302 = vsyncpa [#allocation4], 1
    %1303 = vsyncpa [#allocation7], 1
    %1304 = vsyncpa [#allocation10], 1
    %1305 = vsyncpa [#allocation5], 1

// kernel: tpu_custom_call.1
$region0: #{tpu_custom_call.1}
  #allocation0 [shape = 'u32[]', space=smem, size = 0x4, offset = 0x4, fixed_abs, tag = 'smem constant byte address 0x4 - core index']
  #allocation1 [shape = 'u32[144,128]{1,0:T(1,128)}', space=vmem, size = 0x12000, scoped, tag = 'internal scratch']
  #allocation2 [shape = 'f32[16,128]{1,0:T(8,128)}', space=vmem, size = 0x2000, scoped, tag = 'scratch operand']
  %s0 = inlined_call_operand.vmem [shape: bf16[16,8], index: 0, kind: input, shape index: {}]
  %s1 = inlined_call_operand.hbm [shape: bf16[16,1024], index: 1, kind: input, shape index: {}]
  %s2 = inlined_call_operand.vmem [shape: bf16[8,128], index: 2, kind: input, shape index: {}]
  %s3 = inlined_call_operand.vmem [shape: f32[1,128], index: 3, kind: input, shape index: {}]
  %s4 = inlined_call_operand.hbm [shape: bf16[1024,128], index: 4, kind: input, shape index: {}]
  %s5 = inlined_call_operand.vmem [shape: f32[1,128], index: 5, kind: input, shape index: {}]
  %s6 = inlined_call_operand.hbm [shape: bf16[128,128], index: 6, kind: input, shape index: {}]
  %s7 = inlined_call_operand.hbm [shape: bf16[128,128], index: 7, kind: input, shape index: {}]
  %s8 = inlined_call_operand.vmem [shape: f32[1,128], index: 8, kind: input, shape index: {}]
  %s9 = inlined_call_operand.hbm [shape: bf16[128,128], index: 9, kind: input, shape index: {}]
  %s10 = inlined_call_operand.vmem [shape: f32[1,128], index: 10, kind: input, shape index: {}]
  %s11 = inlined_call_operand.hbm [shape: f32[16,128], index: 11, kind: output, shape index: {}]
  %s12 = sld [smem:[#allocation0]]
  $region82: #{tpu_custom_call.1} parent=0
    _
  %s14 = ssub.s32 1, %s12
  %s15 = scalar_select 0, %s14, %s12
  $region1: #{tpu_custom_call.1} parent=0
    #allocation3 [shape = 'u8[32768]{0}', space=vmem, size = 0x8000, scoped, tag = 'input window, operand 1, single buffered']
    #allocation4 [shape = 's32[1]{0}', space=sflag, size = 0x4, scoped, tag = 'scoped memory for tpu_custom_call.1']
    #allocation5 [shape = 's32[1]{0}', space=sflag, size = 0x4, scoped, tag = 'scoped memory for tpu_custom_call.1']
    #allocation6 [shape = 'u8[262144]{0}', space=vmem, size = 0x40000, scoped, tag = 'input window, operand 4, single buffered']
    #allocation7 [shape = 's32[1]{0}', space=sflag, size = 0x4, scoped, tag = 'scoped memory for tpu_custom_call.1']
    #allocation8 [shape = 'u8[32768]{0}', space=vmem, size = 0x8000, scoped, tag = 'input window, operand 6, single buffered']
    #allocation9 [shape = 'u8[32768]{0}', space=vmem, size = 0x8000, scoped, tag = 'input window, operand 7, single buffered']
    #allocation10 [shape = 's32[1]{0}', space=sflag, size = 0x4, scoped, tag = 'scoped memory for tpu_custom_call.1']
    #allocation11 [shape = 'u8[32768]{0}', space=vmem, size = 0x8000, scoped, tag = 'input window, operand 9, single buffered']
    #allocation12 [shape = 'u8[8192]{0}', space=vmem, size = 0x2000, scoped, tag = 'output window, operand 0, single buffered']
    %16 = vsyncpa [#allocation4], 0
    %17 = vsyncpa [#allocation7], 0
    %18 = vsyncpa [#allocation10], 0
    %19 = vsyncpa [#allocation5], 0
    // Predicated region
    $region2: #{tpu_custom_call.1} parent=1 // pred_check
      _
    $region3: #{tpu_custom_call.1} parent=1 // pred_check_branch
      %21 = sbr.rel (0) target = $region5
    $region4: #{tpu_custom_call.1} parent=1 // pred_region
      _
    $region5: #{tpu_custom_call.1} parent=1 // pred_fallthru
      _
    // Predicated region
    $region6: #{tpu_custom_call.1} parent=1 // pred_check
      _
    $region7: #{tpu_custom_call.1} parent=1 // pred_check_branch
      %23 = sbr.rel (0) target = $region9
    $region8: #{tpu_custom_call.1} parent=1 // pred_region
      %s25 = ssub.s32 1024, 1024
      %26 = vsyncadd [#allocation4], %s25
      %s27 = sshll.u32 [#allocation3], 4
      %s28 = int_to_ptr.vmem [resolvable:$true] %s27
      %33 = dma.hbm_to_vmem [thread:$0]  %s1, 1024, %s28, [#allocation4], 512, 512, 32
    $region9: #{tpu_custom_call.1} parent=1 // pred_fallthru
      _
    // Predicated region
    $region10: #{tpu_custom_call.1} parent=1 // pred_check
      _
    $region11: #{tpu_custom_call.1} parent=1 // pred_check_branch
      %35 = sbr.rel (0) target = $region13
    $region12: #{tpu_custom_call.1} parent=1 // pred_region
      _
    $region13: #{tpu_custom_call.1} parent=1 // pred_fallthru
      _
    // Predicated region
    $region14: #{tpu_custom_call.1} parent=1 // pred_check
      _
    $region15: #{tpu_custom_call.1} parent=1 // pred_check_branch
      %37 = sbr.rel (0) target = $region17
    $region16: #{tpu_custom_call.1} parent=1 // pred_region
      _
    $region17: #{tpu_custom_call.1} parent=1 // pred_fallthru
      _
    // Predicated region
    $region18: #{tpu_custom_call.1} parent=1 // pred_check
      _
    $region19: #{tpu_custom_call.1} parent=1 // pred_check_branch
      %39 = sbr.rel (0) target = $region21
    $region20: #{tpu_custom_call.1} parent=1 // pred_region
      %s41 = ssub.s32 8192, 8192
      %42 = vsyncadd [#allocation7], %s41
      %s43 = sshll.u32 [#allocation6], 4
      %s44 = int_to_ptr.vmem [resolvable:$true] %s43
      %49 = dma.hbm_to_vmem [thread:$0]  %s4, 8192, %s44, [#allocation7], 64, 64, 4
    $region21: #{tpu_custom_call.1} parent=1 // pred_fallthru
      _
    // Predicated region
    $region22: #{tpu_custom_call.1} parent=1 // pred_check
      _
    $region23: #{tpu_custom_call.1} parent=1 // pred_check_branch
      %51 = sbr.rel (0) target = $region25
    $region24: #{tpu_custom_call.1} parent=1 // pred_region
      _
    $region25: #{tpu_custom_call.1} parent=1 // pred_fallthru
      _
    // Predicated region
    $region26: #{tpu_custom_call.1} parent=1 // pred_check
      _
    $region27: #{tpu_custom_call.1} parent=1 // pred_check_branch
      %53 = sbr.rel (0) target = $region29
    $region28: #{tpu_custom_call.1} parent=1 // pred_region
      %s55 = ssub.s32 1024, 1024
      %56 = vsyncadd [#allocation7], %s55
      %s57 = sshll.u32 [#allocation8], 4
      %s58 = int_to_ptr.vmem [resolvable:$true] %s57
      %63 = dma.hbm_to_vmem [thread:$0]  %s6, 1024, %s58, [#allocation7], 64, 64, 4
    $region29: #{tpu_custom_call.1} parent=1 // pred_fallthru
      _
    // Predicated region
    $region30: #{tpu_custom_call.1} parent=1 // pred_check
      _
    $region31: #{tpu_custom_call.1} parent=1 // pred_check_branch
      %65 = sbr.rel (0) target = $region33
    $region32: #{tpu_custom_call.1} parent=1 // pred_region
      %s67 = ssub.s32 1024, 1024
      %68 = vsyncadd [#allocation10], %s67
      %s69 = sshll.u32 [#allocation9], 4
      %s70 = int_to_ptr.vmem [resolvable:$true] %s69
      %75 = dma.hbm_to_vmem [thread:$0]  %s7, 1024, %s70, [#allocation10], 64, 64, 4
    $region33: #{tpu_custom_call.1} parent=1 // pred_fallthru
      _
    // Predicated region
    $region34: #{tpu_custom_call.1} parent=1 // pred_check
      _
    $region35: #{tpu_custom_call.1} parent=1 // pred_check_branch
      %77 = sbr.rel (0) target = $region37
    $region36: #{tpu_custom_call.1} parent=1 // pred_region
      _
    $region37: #{tpu_custom_call.1} parent=1 // pred_fallthru
      _
    // Predicated region
    $region38: #{tpu_custom_call.1} parent=1 // pred_check
      _
    $region39: #{tpu_custom_call.1} parent=1 // pred_check_branch
      %79 = sbr.rel (0) target = $region41
    $region40: #{tpu_custom_call.1} parent=1 // pred_region
      %s81 = ssub.s32 1024, 1024
      %82 = vsyncadd [#allocation10], %s81
      %s83 = sshll.u32 [#allocation11], 4
      %s84 = int_to_ptr.vmem [resolvable:$true] %s83
      %89 = dma.hbm_to_vmem [thread:$0]  %s9, 1024, %s84, [#allocation10], 64, 64, 4
    $region41: #{tpu_custom_call.1} parent=1 // pred_fallthru
      _
    // Predicated region
    $region42: #{tpu_custom_call.1} parent=1 // pred_check
      _
    $region43: #{tpu_custom_call.1} parent=1 // pred_check_branch
      %91 = sbr.rel (0) target = $region45
    $region44: #{tpu_custom_call.1} parent=1 // pred_region
      _
    $region45: #{tpu_custom_call.1} parent=1 // pred_fallthru
      _
    // Predicated region
    $region46: #{tpu_custom_call.1} parent=1 // pred_check
      _
    $region47: #{tpu_custom_call.1} parent=1 // pred_check_branch
      %93 = sbr.rel (0) target = $region49
    $region48: #{tpu_custom_call.1} parent=1 // pred_region
      %94 = dma.done [#allocation4], 1024
    $region49: #{tpu_custom_call.1} parent=1 // pred_fallthru
      _
    // Predicated region
    $region50: #{tpu_custom_call.1} parent=1 // pred_check
      _
    $region51: #{tpu_custom_call.1} parent=1 // pred_check_branch
      %96 = sbr.rel (0) target = $region53
    $region52: #{tpu_custom_call.1} parent=1 // pred_region
      %97 = dma.done [#allocation7], 8192
    $region53: #{tpu_custom_call.1} parent=1 // pred_fallthru
      _
    // Predicated region
    $region54: #{tpu_custom_call.1} parent=1 // pred_check
      _
    $region55: #{tpu_custom_call.1} parent=1 // pred_check_branch
      %99 = sbr.rel (0) target = $region57
    $region56: #{tpu_custom_call.1} parent=1 // pred_region
      %100 = dma.done [#allocation7], 1024
    $region57: #{tpu_custom_call.1} parent=1 // pred_fallthru
      _
    // Predicated region
    $region58: #{tpu_custom_call.1} parent=1 // pred_check
      _
    $region59: #{tpu_custom_call.1} parent=1 // pred_check_branch
      %102 = sbr.rel (0) target = $region61
    $region60: #{tpu_custom_call.1} parent=1 // pred_region
      %103 = dma.done [#allocation10], 1024
    $region61: #{tpu_custom_call.1} parent=1 // pred_fallthru
      _
    // Predicated region
    $region62: #{tpu_custom_call.1} parent=1 // pred_check
      _
    $region63: #{tpu_custom_call.1} parent=1 // pred_check_branch
      %105 = sbr.rel (0) target = $region65
    $region64: #{tpu_custom_call.1} parent=1 // pred_region
      %106 = dma.done [#allocation10], 1024
    $region65: #{tpu_custom_call.1} parent=1 // pred_fallthru
      _
    %p108 = scmp.eq.s32.totalorder 0, 0
    // Predicated region
    $region66: #{tpu_custom_call.1} parent=1 // pred_check
      %p109 = pneg %p108
    $region67: #{tpu_custom_call.1} parent=1 // pred_check_branch
      %111 = sbr.rel (%p109) target = $region69
    $region68: #{tpu_custom_call.1} parent=1 // pred_region
      %112 = vst [vmem:[#allocation2] sm:$0xff] 0.0
      %113 = vst [vmem:[#allocation2 + $0x8] sm:$0xff] 0.0
    $region69: #{tpu_custom_call.1} parent=1 // pred_fallthru
      _
    %v114 = vld [vmem:[#allocation2] sm:$0xff]
    %v115 = vld [vmem:[#allocation2 + $0x8] sm:$0xff]
    %v116 = vld [vmem:[#allocation3] sm:$0xff]
    %v117 = vld [vmem:[#allocation3 + $0x8] sm:$0xff]
    %v118 = vld [vmem:[#allocation3 + $0x10] sm:$0xff]
    %v119 = vld [vmem:[#allocation3 + $0x18] sm:$0xff]
    %v120 = vld [vmem:[#allocation3 + $0x20] sm:$0xff]
    %v121 = vld [vmem:[#allocation3 + $0x28] sm:$0xff]
    %v122 = vld [vmem:[#allocation3 + $0x30] sm:$0xff]
    %v123 = vld [vmem:[#allocation3 + $0x38] sm:$0xff]
    %v124 = vld [vmem:[#allocation6] sm:$0xf]
    %v125 = vld [vmem:[#allocation6 + $0x4] sm:$0xf]
    %v126 = vld [vmem:[#allocation6 + $0x8] sm:$0xf]
    %v127 = vld [vmem:[#allocation6 + $0xc] sm:$0xf]
    %v128 = vld [vmem:[#allocation6 + $0x10] sm:$0xf]
    %v129 = vld [vmem:[#allocation6 + $0x14] sm:$0xf]
    %v130 = vld [vmem:[#allocation6 + $0x18] sm:$0xf]
    %v131 = vld [vmem:[#allocation6 + $0x1c] sm:$0xf]
    %v132 = vld [vmem:[#allocation6 + $0x20] sm:$0xf]
    %v133 = vld [vmem:[#allocation6 + $0x24] sm:$0xf]
    %v134 = vld [vmem:[#allocation6 + $0x28] sm:$0xf]
    %v135 = vld [vmem:[#allocation6 + $0x2c] sm:$0xf]
    %v136 = vld [vmem:[#allocation6 + $0x30] sm:$0xf]
    %v137 = vld [vmem:[#allocation6 + $0x34] sm:$0xf]
    %v138 = vld [vmem:[#allocation6 + $0x38] sm:$0xf]
    %v139 = vld [vmem:[#allocation6 + $0x3c] sm:$0xf]
    %v140 = vld [vmem:[#allocation6 + $0x40] sm:$0xf]
    %v141 = vld [vmem:[#allocation6 + $0x44] sm:$0xf]
    %v142 = vld [vmem:[#allocation6 + $0x48] sm:$0xf]
    %v143 = vld [vmem:[#allocation6 + $0x4c] sm:$0xf]
    %v144 = vld [vmem:[#allocation6 + $0x50] sm:$0xf]
    %v145 = vld [vmem:[#allocation6 + $0x54] sm:$0xf]
    %v146 = vld [vmem:[#allocation6 + $0x58] sm:$0xf]
    %v147 = vld [vmem:[#allocation6 + $0x5c] sm:$0xf]
    %v148 = vld [vmem:[#allocation6 + $0x60] sm:$0xf]
    %v149 = vld [vmem:[#allocation6 + $0x64] sm:$0xf]
    %v150 = vld [vmem:[#allocation6 + $0x68] sm:$0xf]
    %v151 = vld [vmem:[#allocation6 + $0x6c] sm:$0xf]
    %v152 = vld [vmem:[#allocation6 + $0x70] sm:$0xf]
    %v153 = vld [vmem:[#allocation6 + $0x74] sm:$0xf]
    %v154 = vld [vmem:[#allocation6 + $0x78] sm:$0xf]
    %v155 = vld [vmem:[#allocation6 + $0x7c] sm:$0xf]
    %v156 = vld [vmem:[#allocation6 + $0x80] sm:$0xf]
    %v157 = vld [vmem:[#allocation6 + $0x84] sm:$0xf]
    %v158 = vld [vmem:[#allocation6 + $0x88] sm:$0xf]
    %v159 = vld [vmem:[#allocation6 + $0x8c] sm:$0xf]
    %v160 = vld [vmem:[#allocation6 + $0x90] sm:$0xf]
    %v161 = vld [vmem:[#allocation6 + $0x94] sm:$0xf]
    %v162 = vld [vmem:[#allocation6 + $0x98] sm:$0xf]
    %v163 = vld [vmem:[#allocation6 + $0x9c] sm:$0xf]
    %v164 = vld [vmem:[#allocation6 + $0xa0] sm:$0xf]
    %v165 = vld [vmem:[#allocation6 + $0xa4] sm:$0xf]
    %v166 = vld [vmem:[#allocation6 + $0xa8] sm:$0xf]
    %v167 = vld [vmem:[#allocation6 + $0xac] sm:$0xf]
    %v168 = vld [vmem:[#allocation6 + $0xb0] sm:$0xf]
    %v169 = vld [vmem:[#allocation6 + $0xb4] sm:$0xf]
    %v170 = vld [vmem:[#allocation6 + $0xb8] sm:$0xf]
    %v171 = vld [vmem:[#allocation6 + $0xbc] sm:$0xf]
    %v172 = vld [vmem:[#allocation6 + $0xc0] sm:$0xf]
    %v173 = vld [vmem:[#allocation6 + $0xc4] sm:$0xf]
    %v174 = vld [vmem:[#allocation6 + $0xc8] sm:$0xf]
    %v175 = vld [vmem:[#allocation6 + $0xcc] sm:$0xf]
    %v176 = vld [vmem:[#allocation6 + $0xd0] sm:$0xf]
    %v177 = vld [vmem:[#allocation6 + $0xd4] sm:$0xf]
    %v178 = vld [vmem:[#allocation6 + $0xd8] sm:$0xf]
    %v179 = vld [vmem:[#allocation6 + $0xdc] sm:$0xf]
    %v180 = vld [vmem:[#allocation6 + $0xe0] sm:$0xf]
    %v181 = vld [vmem:[#allocation6 + $0xe4] sm:$0xf]
    %v182 = vld [vmem:[#allocation6 + $0xe8] sm:$0xf]
    %v183 = vld [vmem:[#allocation6 + $0xec] sm:$0xf]
    %v184 = vld [vmem:[#allocation6 + $0xf0] sm:$0xf]
    %v185 = vld [vmem:[#allocation6 + $0xf4] sm:$0xf]
    %v186 = vld [vmem:[#allocation6 + $0xf8] sm:$0xf]
    %v187 = vld [vmem:[#allocation6 + $0xfc] sm:$0xf]
    %v188 = vld [vmem:[#allocation6 + $0x100] sm:$0xf]
    %v189 = vld [vmem:[#allocation6 + $0x104] sm:$0xf]
    %v190 = vld [vmem:[#allocation6 + $0x108] sm:$0xf]
    %v191 = vld [vmem:[#allocation6 + $0x10c] sm:$0xf]
    %v192 = vld [vmem:[#allocation6 + $0x110] sm:$0xf]
    %v193 = vld [vmem:[#allocation6 + $0x114] sm:$0xf]
    %v194 = vld [vmem:[#allocation6 + $0x118] sm:$0xf]
    %v195 = vld [vmem:[#allocation6 + $0x11c] sm:$0xf]
    %v196 = vld [vmem:[#allocation6 + $0x120] sm:$0xf]
    %v197 = vld [vmem:[#allocation6 + $0x124] sm:$0xf]
    %v198 = vld [vmem:[#allocation6 + $0x128] sm:$0xf]
    %v199 = vld [vmem:[#allocation6 + $0x12c] sm:$0xf]
    %v200 = vld [vmem:[#allocation6 + $0x130] sm:$0xf]
    %v201 = vld [vmem:[#allocation6 + $0x134] sm:$0xf]
    %v202 = vld [vmem:[#allocation6 + $0x138] sm:$0xf]
    %v203 = vld [vmem:[#allocation6 + $0x13c] sm:$0xf]
    %v204 = vld [vmem:[#allocation6 + $0x140] sm:$0xf]
    %v205 = vld [vmem:[#allocation6 + $0x144] sm:$0xf]
    %v206 = vld [vmem:[#allocation6 + $0x148] sm:$0xf]
    %v207 = vld [vmem:[#allocation6 + $0x14c] sm:$0xf]
    %v208 = vld [vmem:[#allocation6 + $0x150] sm:$0xf]
    %v209 = vld [vmem:[#allocation6 + $0x154] sm:$0xf]
    %v210 = vld [vmem:[#allocation6 + $0x158] sm:$0xf]
    %v211 = vld [vmem:[#allocation6 + $0x15c] sm:$0xf]
    %v212 = vld [vmem:[#allocation6 + $0x160] sm:$0xf]
    %v213 = vld [vmem:[#allocation6 + $0x164] sm:$0xf]
    %v214 = vld [vmem:[#allocation6 + $0x168] sm:$0xf]
    %v215 = vld [vmem:[#allocation6 + $0x16c] sm:$0xf]
    %v216 = vld [vmem:[#allocation6 + $0x170] sm:$0xf]
    %v217 = vld [vmem:[#allocation6 + $0x174] sm:$0xf]
    %v218 = vld [vmem:[#allocation6 + $0x178] sm:$0xf]
    %v219 = vld [vmem:[#allocation6 + $0x17c] sm:$0xf]
    %v220 = vld [vmem:[#allocation6 + $0x180] sm:$0xf]
    %v221 = vld [vmem:[#allocation6 + $0x184] sm:$0xf]
    %v222 = vld [vmem:[#allocation6 + $0x188] sm:$0xf]
    %v223 = vld [vmem:[#allocation6 + $0x18c] sm:$0xf]
    %v224 = vld [vmem:[#allocation6 + $0x190] sm:$0xf]
    %v225 = vld [vmem:[#allocation6 + $0x194] sm:$0xf]
    %v226 = vld [vmem:[#allocation6 + $0x198] sm:$0xf]
    %v227 = vld [vmem:[#allocation6 + $0x19c] sm:$0xf]
    %v228 = vld [vmem:[#allocation6 + $0x1a0] sm:$0xf]
    %v229 = vld [vmem:[#allocation6 + $0x1a4] sm:$0xf]
    %v230 = vld [vmem:[#allocation6 + $0x1a8] sm:$0xf]
    %v231 = vld [vmem:[#allocation6 + $0x1ac] sm:$0xf]
    %v232 = vld [vmem:[#allocation6 + $0x1b0] sm:$0xf]
    %v233 = vld [vmem:[#allocation6 + $0x1b4] sm:$0xf]
    %v234 = vld [vmem:[#allocation6 + $0x1b8] sm:$0xf]
    %v235 = vld [vmem:[#allocation6 + $0x1bc] sm:$0xf]
    %v236 = vld [vmem:[#allocation6 + $0x1c0] sm:$0xf]
    %v237 = vld [vmem:[#allocation6 + $0x1c4] sm:$0xf]
    %v238 = vld [vmem:[#allocation6 + $0x1c8] sm:$0xf]
    %v239 = vld [vmem:[#allocation6 + $0x1cc] sm:$0xf]
    %v240 = vld [vmem:[#allocation6 + $0x1d0] sm:$0xf]
    %v241 = vld [vmem:[#allocation6 + $0x1d4] sm:$0xf]
    %v242 = vld [vmem:[#allocation6 + $0x1d8] sm:$0xf]
    %v243 = vld [vmem:[#allocation6 + $0x1dc] sm:$0xf]
    %v244 = vld [vmem:[#allocation6 + $0x1e0] sm:$0xf]
    %v245 = vld [vmem:[#allocation6 + $0x1e4] sm:$0xf]
    %v246 = vld [vmem:[#allocation6 + $0x1e8] sm:$0xf]
    %v247 = vld [vmem:[#allocation6 + $0x1ec] sm:$0xf]
    %v248 = vld [vmem:[#allocation6 + $0x1f0] sm:$0xf]
    %v249 = vld [vmem:[#allocation6 + $0x1f4] sm:$0xf]
    %v250 = vld [vmem:[#allocation6 + $0x1f8] sm:$0xf]
    %v251 = vld [vmem:[#allocation6 + $0x1fc] sm:$0xf]
    %v260 = vunpack.c.l.b16 %v116
    %v261 = vunpack.c.h.b16 %v116
    %v262 = vunpack.c.l.b16 %v117
    %v263 = vunpack.c.h.b16 %v117
    %v264 = vunpack.c.l.b16 %v118
    %v265 = vunpack.c.h.b16 %v118
    %v266 = vunpack.c.l.b16 %v119
    %v267 = vunpack.c.h.b16 %v119
    %v268 = vunpack.c.l.b16 %v120
    %v269 = vunpack.c.h.b16 %v120
    %v270 = vunpack.c.l.b16 %v121
    %v271 = vunpack.c.h.b16 %v121
    %v272 = vunpack.c.l.b16 %v122
    %v273 = vunpack.c.h.b16 %v122
    %v274 = vunpack.c.l.b16 %v123
    %v275 = vunpack.c.h.b16 %v123
    %v276 = vpack.c.b16 %v268, %v260
    %v277 = vpack.c.b16 %v269, %v261
    %v278 = vpack.c.b16 %v270, %v262
    %v279 = vpack.c.b16 %v271, %v263
    %v280 = vpack.c.b16 %v272, %v264
    %v281 = vpack.c.b16 %v273, %v265
    %v282 = vpack.c.b16 %v274, %v266
    %v283 = vpack.c.b16 %v275, %v267
    %v420 = vunpack.c.l.b16 %v124
    %v421 = vunpack.c.l.b16 %v125
    %v422 = vunpack.c.l.b16 %v126
    %v423 = vunpack.c.l.b16 %v127
    %v424 = vunpack.c.l.b16 %v128
    %v425 = vunpack.c.l.b16 %v129
    %v426 = vunpack.c.l.b16 %v130
    %v427 = vunpack.c.l.b16 %v131
    %v428 = vunpack.c.l.b16 %v132
    %v429 = vunpack.c.l.b16 %v133
    %v430 = vunpack.c.l.b16 %v134
    %v431 = vunpack.c.l.b16 %v135
    %v432 = vunpack.c.l.b16 %v136
    %v433 = vunpack.c.l.b16 %v137
    %v434 = vunpack.c.l.b16 %v138
    %v435 = vunpack.c.l.b16 %v139
    %v436 = vunpack.c.l.b16 %v140
    %v437 = vunpack.c.l.b16 %v141
    %v438 = vunpack.c.l.b16 %v142
    %v439 = vunpack.c.l.b16 %v143
    %v440 = vunpack.c.l.b16 %v144
    %v441 = vunpack.c.l.b16 %v145
    %v442 = vunpack.c.l.b16 %v146
    %v443 = vunpack.c.l.b16 %v147
    %v444 = vunpack.c.l.b16 %v148
    %v445 = vunpack.c.l.b16 %v149
    %v446 = vunpack.c.l.b16 %v150
    %v447 = vunpack.c.l.b16 %v151
    %v448 = vunpack.c.l.b16 %v152
    %v449 = vunpack.c.l.b16 %v153
    %v450 = vunpack.c.l.b16 %v154
    %v451 = vunpack.c.l.b16 %v155
    %v452 = vunpack.c.l.b16 %v156
    %v453 = vunpack.c.l.b16 %v157
    %v454 = vunpack.c.l.b16 %v158
    %v455 = vunpack.c.l.b16 %v159
    %v456 = vunpack.c.l.b16 %v160
    %v457 = vunpack.c.l.b16 %v161
    %v458 = vunpack.c.l.b16 %v162
    %v459 = vunpack.c.l.b16 %v163
    %v460 = vunpack.c.l.b16 %v164
    %v461 = vunpack.c.l.b16 %v165
    %v462 = vunpack.c.l.b16 %v166
    %v463 = vunpack.c.l.b16 %v167
    %v464 = vunpack.c.l.b16 %v168
    %v465 = vunpack.c.l.b16 %v169
    %v466 = vunpack.c.l.b16 %v170
    %v467 = vunpack.c.l.b16 %v171
    %v468 = vunpack.c.l.b16 %v172
    %v469 = vunpack.c.l.b16 %v173
    %v470 = vunpack.c.l.b16 %v174
    %v471 = vunpack.c.l.b16 %v175
    %v472 = vunpack.c.l.b16 %v176
    %v473 = vunpack.c.l.b16 %v177
    %v474 = vunpack.c.l.b16 %v178
    %v475 = vunpack.c.l.b16 %v179
    %v476 = vunpack.c.l.b16 %v180
    %v477 = vunpack.c.l.b16 %v181
    %v478 = vunpack.c.l.b16 %v182
    %v479 = vunpack.c.l.b16 %v183
    %v480 = vunpack.c.l.b16 %v184
    %v481 = vunpack.c.l.b16 %v185
    %v482 = vunpack.c.l.b16 %v186
    %v483 = vunpack.c.l.b16 %v187
    %v484 = vunpack.c.l.b16 %v188
    %v485 = vunpack.c.l.b16 %v189
    %v486 = vunpack.c.l.b16 %v190
    %v487 = vunpack.c.l.b16 %v191
    %v488 = vunpack.c.l.b16 %v192
    %v489 = vunpack.c.l.b16 %v193
    %v490 = vunpack.c.l.b16 %v194
    %v491 = vunpack.c.l.b16 %v195
    %v492 = vunpack.c.l.b16 %v196
    %v493 = vunpack.c.l.b16 %v197
    %v494 = vunpack.c.l.b16 %v198
    %v495 = vunpack.c.l.b16 %v199
    %v496 = vunpack.c.l.b16 %v200
    %v497 = vunpack.c.l.b16 %v201
    %v498 = vunpack.c.l.b16 %v202
    %v499 = vunpack.c.l.b16 %v203
    %v500 = vunpack.c.l.b16 %v204
    %v501 = vunpack.c.l.b16 %v205
    %v502 = vunpack.c.l.b16 %v206
    %v503 = vunpack.c.l.b16 %v207
    %v504 = vunpack.c.l.b16 %v208
    %v505 = vunpack.c.l.b16 %v209
    %v506 = vunpack.c.l.b16 %v210
    %v507 = vunpack.c.l.b16 %v211
    %v508 = vunpack.c.l.b16 %v212
    %v509 = vunpack.c.l.b16 %v213
    %v510 = vunpack.c.l.b16 %v214
    %v511 = vunpack.c.l.b16 %v215
    %v512 = vunpack.c.l.b16 %v216
    %v513 = vunpack.c.l.b16 %v217
    %v514 = vunpack.c.l.b16 %v218
    %v515 = vunpack.c.l.b16 %v219
    %v516 = vunpack.c.l.b16 %v220
    %v517 = vunpack.c.l.b16 %v221
    %v518 = vunpack.c.l.b16 %v222
    %v519 = vunpack.c.l.b16 %v223
    %v520 = vunpack.c.l.b16 %v224
    %v521 = vunpack.c.l.b16 %v225
    %v522 = vunpack.c.l.b16 %v226
    %v523 = vunpack.c.l.b16 %v227
    %v524 = vunpack.c.l.b16 %v228
    %v525 = vunpack.c.l.b16 %v229
    %v526 = vunpack.c.l.b16 %v230
    %v527 = vunpack.c.l.b16 %v231
    %v528 = vunpack.c.l.b16 %v232
    %v529 = vunpack.c.l.b16 %v233
    %v530 = vunpack.c.l.b16 %v234
    %v531 = vunpack.c.l.b16 %v235
    %v532 = vunpack.c.l.b16 %v236
    %v533 = vunpack.c.l.b16 %v237
    %v534 = vunpack.c.l.b16 %v238
    %v535 = vunpack.c.l.b16 %v239
    %v536 = vunpack.c.l.b16 %v240
    %v537 = vunpack.c.l.b16 %v241
    %v538 = vunpack.c.l.b16 %v242
    %v539 = vunpack.c.l.b16 %v243
    %v540 = vunpack.c.l.b16 %v244
    %v541 = vunpack.c.l.b16 %v245
    %v542 = vunpack.c.l.b16 %v246
    %v543 = vunpack.c.l.b16 %v247
    %v544 = vunpack.c.l.b16 %v248
    %v545 = vunpack.c.l.b16 %v249
    %v546 = vunpack.c.l.b16 %v250
    %v547 = vunpack.c.l.b16 %v251
    %v548 = vpack.c.b16 %v421, %v420
    %v549 = vpack.c.b16 %v423, %v422
    %v550 = vpack.c.b16 %v425, %v424
    %v551 = vpack.c.b16 %v427, %v426
    %v552 = vpack.c.b16 %v429, %v428
    %v553 = vpack.c.b16 %v431, %v430
    %v554 = vpack.c.b16 %v433, %v432
    %v555 = vpack.c.b16 %v435, %v434
    %v556 = vpack.c.b16 %v437, %v436
    %v557 = vpack.c.b16 %v439, %v438
    %v558 = vpack.c.b16 %v441, %v440
    %v559 = vpack.c.b16 %v443, %v442
    %v560 = vpack.c.b16 %v445, %v444
    %v561 = vpack.c.b16 %v447, %v446
    %v562 = vpack.c.b16 %v449, %v448
    %v563 = vpack.c.b16 %v451, %v450
    %v564 = vpack.c.b16 %v453, %v452
    %v565 = vpack.c.b16 %v455, %v454
    %v566 = vpack.c.b16 %v457, %v456
    %v567 = vpack.c.b16 %v459, %v458
    %v568 = vpack.c.b16 %v461, %v460
    %v569 = vpack.c.b16 %v463, %v462
    %v570 = vpack.c.b16 %v465, %v464
    %v571 = vpack.c.b16 %v467, %v466
    %v572 = vpack.c.b16 %v469, %v468
    %v573 = vpack.c.b16 %v471, %v470
    %v574 = vpack.c.b16 %v473, %v472
    %v575 = vpack.c.b16 %v475, %v474
    %v576 = vpack.c.b16 %v477, %v476
    %v577 = vpack.c.b16 %v479, %v478
    %v578 = vpack.c.b16 %v481, %v480
    %v579 = vpack.c.b16 %v483, %v482
    %v580 = vpack.c.b16 %v485, %v484
    %v581 = vpack.c.b16 %v487, %v486
    %v582 = vpack.c.b16 %v489, %v488
    %v583 = vpack.c.b16 %v491, %v490
    %v584 = vpack.c.b16 %v493, %v492
    %v585 = vpack.c.b16 %v495, %v494
    %v586 = vpack.c.b16 %v497, %v496
    %v587 = vpack.c.b16 %v499, %v498
    %v588 = vpack.c.b16 %v501, %v500
    %v589 = vpack.c.b16 %v503, %v502
    %v590 = vpack.c.b16 %v505, %v504
    %v591 = vpack.c.b16 %v507, %v506
    %v592 = vpack.c.b16 %v509, %v508
    %v593 = vpack.c.b16 %v511, %v510
    %v594 = vpack.c.b16 %v513, %v512
    %v595 = vpack.c.b16 %v515, %v514
    %v596 = vpack.c.b16 %v517, %v516
    %v597 = vpack.c.b16 %v519, %v518
    %v598 = vpack.c.b16 %v521, %v520
    %v599 = vpack.c.b16 %v523, %v522
    %v600 = vpack.c.b16 %v525, %v524
    %v601 = vpack.c.b16 %v527, %v526
    %v602 = vpack.c.b16 %v529, %v528
    %v603 = vpack.c.b16 %v531, %v530
    %v604 = vpack.c.b16 %v533, %v532
    %v605 = vpack.c.b16 %v535, %v534
    %v606 = vpack.c.b16 %v537, %v536
    %v607 = vpack.c.b16 %v539, %v538
    %v608 = vpack.c.b16 %v541, %v540
    %v609 = vpack.c.b16 %v543, %v542
    %v610 = vpack.c.b16 %v545, %v544
    %v611 = vpack.c.b16 %v547, %v546
    %676 = vmatprep.subr.bf16.mxu0 0
    %677 = vmatpush1.bf16.msra.mxu0 %v548
    %678 = vmatprep.subr.bf16.mxu0 0
    %679 = vmatpush1.bf16.msra.mxu0 %v549
    %680 = vmatprep.subr.bf16.mxu0 0
    %681 = vmatpush1.bf16.msra.mxu0 %v550
    %682 = vmatprep.subr.bf16.mxu0 0
    %683 = vmatpush1.bf16.msra.mxu0 %v551
    %684 = vmatprep.subr.bf16.mxu0 0
    %685 = vmatpush1.bf16.msra.mxu0 %v552
    %686 = vmatprep.subr.bf16.mxu0 0
    %687 = vmatpush1.bf16.msra.mxu0 %v553
    %688 = vmatprep.subr.bf16.mxu0 0
    %689 = vmatpush1.bf16.msra.mxu0 %v554
    %690 = vmatprep.subr.bf16.mxu0 0
    %691 = vmatpush1.bf16.msra.mxu0 %v555
    %692 = vmatprep.subr.bf16.mxu0 0
    %693 = vmatpush1.bf16.msra.mxu0 %v556
    %694 = vmatprep.subr.bf16.mxu0 0
    %695 = vmatpush1.bf16.msra.mxu0 %v557
    %696 = vmatprep.subr.bf16.mxu0 0
    %697 = vmatpush1.bf16.msra.mxu0 %v558
    %698 = vmatprep.subr.bf16.mxu0 0
    %699 = vmatpush1.bf16.msra.mxu0 %v559
    %700 = vmatprep.subr.bf16.mxu0 0
    %701 = vmatpush1.bf16.msra.mxu0 %v560
    %702 = vmatprep.subr.bf16.mxu0 0
    %703 = vmatpush1.bf16.msra.mxu0 %v561
    %704 = vmatprep.subr.bf16.mxu0 0
    %705 = vmatpush1.bf16.msra.mxu0 %v562
    %706 = vmatprep.subr.bf16.mxu0 0
    %707 = vmatpush1.bf16.msra.mxu0 %v563
    %708 = vmatprep.mubr.bf16.mxu0 %v277
    %709 = vmatmul.mubr.bf16.gmra.mrb[0].mxu0 %v276
    %v710 = vpop.f32.mrb[0].mxu0
    %v711 = vadd.f32 0.0, %v710
    %v712 = vpop.f32.mrb[0].mxu0
    %v713 = vpop.f32.mrb[0].mxu0
    %v714 = vadd.f32 0.0, %v713
    %v715 = vpop.f32.mrb[0].mxu0
    %716 = vdwg.mxu0
    %717 = vmatprep.subr.bf16.mxu0 0
    %718 = vmatpush1.bf16.msra.mxu0 %v564
    %719 = vmatprep.subr.bf16.mxu0 0
    %720 = vmatpush1.bf16.msra.mxu0 %v565
    %721 = vmatprep.subr.bf16.mxu0 0
    %722 = vmatpush1.bf16.msra.mxu0 %v566
    %723 = vmatprep.subr.bf16.mxu0 0
    %724 = vmatpush1.bf16.msra.mxu0 %v567
    %725 = vmatprep.subr.bf16.mxu0 0
    %726 = vmatpush1.bf16.msra.mxu0 %v568
    %727 = vmatprep.subr.bf16.mxu0 0
    %728 = vmatpush1.bf16.msra.mxu0 %v569
    %729 = vmatprep.subr.bf16.mxu0 0
    %730 = vmatpush1.bf16.msra.mxu0 %v570
    %731 = vmatprep.subr.bf16.mxu0 0
    %732 = vmatpush1.bf16.msra.mxu0 %v571
    %733 = vmatprep.subr.bf16.mxu0 0
    %734 = vmatpush1.bf16.msra.mxu0 %v572
    %735 = vmatprep.subr.bf16.mxu0 0
    %736 = vmatpush1.bf16.msra.mxu0 %v573
    %737 = vmatprep.subr.bf16.mxu0 0
    %738 = vmatpush1.bf16.msra.mxu0 %v574
    %739 = vmatprep.subr.bf16.mxu0 0
    %740 = vmatpush1.bf16.msra.mxu0 %v575
    %741 = vmatprep.subr.bf16.mxu0 0
    %742 = vmatpush1.bf16.msra.mxu0 %v576
    %743 = vmatprep.subr.bf16.mxu0 0
    %744 = vmatpush1.bf16.msra.mxu0 %v577
    %745 = vmatprep.subr.bf16.mxu0 0
    %746 = vmatpush1.bf16.msra.mxu0 %v578
    %747 = vmatprep.subr.bf16.mxu0 0
    %748 = vmatpush1.bf16.msra.mxu0 %v579
    %749 = vmatprep.mubr.bf16.mxu0 %v279
    %750 = vmatmul.mubr.bf16.gmra.mrb[0].mxu0 %v278
    %v751 = vpop.f32.mrb[0].mxu0
    %v752 = vadd.f32 %v711, %v751
    %v753 = vpop.f32.mrb[0].mxu0
    %v754 = vpop.f32.mrb[0].mxu0
    %v755 = vadd.f32 %v714, %v754
    %v756 = vpop.f32.mrb[0].mxu0
    %757 = vdwg.mxu0
    %758 = vmatprep.subr.bf16.mxu0 0
    %759 = vmatpush1.bf16.msra.mxu0 %v580
    %760 = vmatprep.subr.bf16.mxu0 0
    %761 = vmatpush1.bf16.msra.mxu0 %v581
    %762 = vmatprep.subr.bf16.mxu0 0
    %763 = vmatpush1.bf16.msra.mxu0 %v582
    %764 = vmatprep.subr.bf16.mxu0 0
    %765 = vmatpush1.bf16.msra.mxu0 %v583
    %766 = vmatprep.subr.bf16.mxu0 0
    %767 = vmatpush1.bf16.msra.mxu0 %v584
    %768 = vmatprep.subr.bf16.mxu0 0
    %769 = vmatpush1.bf16.msra.mxu0 %v585
    %770 = vmatprep.subr.bf16.mxu0 0
    %771 = vmatpush1.bf16.msra.mxu0 %v586
    %772 = vmatprep.subr.bf16.mxu0 0
    %773 = vmatpush1.bf16.msra.mxu0 %v587
    %774 = vmatprep.subr.bf16.mxu0 0
    %775 = vmatpush1.bf16.msra.mxu0 %v588
    %776 = vmatprep.subr.bf16.mxu0 0
    %777 = vmatpush1.bf16.msra.mxu0 %v589
    %778 = vmatprep.subr.bf16.mxu0 0
    %779 = vmatpush1.bf16.msra.mxu0 %v590
    %780 = vmatprep.subr.bf16.mxu0 0
    %781 = vmatpush1.bf16.msra.mxu0 %v591
    %782 = vmatprep.subr.bf16.mxu0 0
    %783 = vmatpush1.bf16.msra.mxu0 %v592
    %784 = vmatprep.subr.bf16.mxu0 0
    %785 = vmatpush1.bf16.msra.mxu0 %v593
    %786 = vmatprep.subr.bf16.mxu0 0
    %787 = vmatpush1.bf16.msra.mxu0 %v594
    %788 = vmatprep.subr.bf16.mxu0 0
    %789 = vmatpush1.bf16.msra.mxu0 %v595
    %790 = vmatprep.mubr.bf16.mxu0 %v281
    %791 = vmatmul.mubr.bf16.gmra.mrb[0].mxu0 %v280
    %v792 = vpop.f32.mrb[0].mxu0
    %v793 = vadd.f32 %v752, %v792
    %v794 = vpop.f32.mrb[0].mxu0
    %v795 = vpop.f32.mrb[0].mxu0
    %v796 = vadd.f32 %v755, %v795
    %v797 = vpop.f32.mrb[0].mxu0
    %798 = vdwg.mxu0
    %799 = vmatprep.subr.bf16.mxu0 0
    %800 = vmatpush1.bf16.msra.mxu0 %v596
    %801 = vmatprep.subr.bf16.mxu0 0
    %802 = vmatpush1.bf16.msra.mxu0 %v597
    %803 = vmatprep.subr.bf16.mxu0 0
    %804 = vmatpush1.bf16.msra.mxu0 %v598
    %805 = vmatprep.subr.bf16.mxu0 0
    %806 = vmatpush1.bf16.msra.mxu0 %v599
    %807 = vmatprep.subr.bf16.mxu0 0
    %808 = vmatpush1.bf16.msra.mxu0 %v600
    %809 = vmatprep.subr.bf16.mxu0 0
    %810 = vmatpush1.bf16.msra.mxu0 %v601
    %811 = vmatprep.subr.bf16.mxu0 0
    %812 = vmatpush1.bf16.msra.mxu0 %v602
    %813 = vmatprep.subr.bf16.mxu0 0
    %814 = vmatpush1.bf16.msra.mxu0 %v603
    %815 = vmatprep.subr.bf16.mxu0 0
    %816 = vmatpush1.bf16.msra.mxu0 %v604
    %817 = vmatprep.subr.bf16.mxu0 0
    %818 = vmatpush1.bf16.msra.mxu0 %v605
    %819 = vmatprep.subr.bf16.mxu0 0
    %820 = vmatpush1.bf16.msra.mxu0 %v606
    %821 = vmatprep.subr.bf16.mxu0 0
    %822 = vmatpush1.bf16.msra.mxu0 %v607
    %823 = vmatprep.subr.bf16.mxu0 0
    %824 = vmatpush1.bf16.msra.mxu0 %v608
    %825 = vmatprep.subr.bf16.mxu0 0
    %826 = vmatpush1.bf16.msra.mxu0 %v609
    %827 = vmatprep.subr.bf16.mxu0 0
    %828 = vmatpush1.bf16.msra.mxu0 %v610
    %829 = vmatprep.subr.bf16.mxu0 0
    %830 = vmatpush1.bf16.msra.mxu0 %v611
    %831 = vmatprep.mubr.bf16.mxu0 %v283
    %832 = vmatmul.mubr.bf16.gmra.mrb[0].mxu0 %v282
    %v833 = vpop.f32.mrb[0].mxu0
    %v834 = vadd.f32 %v793, %v833
    %v835 = vpop.f32.mrb[0].mxu0
    %v836 = vpop.f32.mrb[0].mxu0
    %v837 = vadd.f32 %v796, %v836
    %v838 = vpop.f32.mrb[0].mxu0
    %839 = vdwg.mxu0
    %v840 = vadd.f32 %v114, %v834
    %v841 = vadd.f32 %v115, %v837
    %842 = vst [vmem:[#allocation2] sm:$0xff] %v840
    %843 = vst [vmem:[#allocation2 + $0x8] sm:$0xff] %v841
    // Predicated region
    $region70: #{tpu_custom_call.1} parent=1 // pred_check
      %p844 = pneg %p108
    $region71: #{tpu_custom_call.1} parent=1 // pred_check_branch
      %846 = sbr.rel (%p844) target = $region73
    $region72: #{tpu_custom_call.1} parent=1 // pred_region
      %v847 = vld [vmem:[%s0] sm:$0xf]
      %v848 = vld [vmem:[%s0 + $0x4] sm:$0xf]
      %v849 = vld [vmem:[%s2] sm:$0xf]
      %v850 = vld [vmem:[%s3] sm:$0x1]
      %v852 = vlaneseq
      %v853 = vshrl.u32 %v852, 7
      %v854 = vsub.s32 0, %v853
      %v855 = vrot.slane %v850, %v854
      %v859 = vunpack.c.l.b16 %v847
      %v860 = vunpack.c.l.b16 %v848
      %v861 = vpack.c.b16 %v860, %v859
      %vm862 = vcmask 64512
      %v864 = vsel %vm862, %v861, 0
      %vm866 = vcmask 1043456
      %v868 = vsel %vm866, %v849, 0
      %870 = vmatprep.subr.bf16.mxu0 0
      %871 = vmatpush1.bf16.msra.mxu0 %v868
      %872 = vmatprep.subr.bf16.mxu0 0
      %873 = vmatpush1.bf16.msra.mxu0 0
      %874 = vmatprep.subr.bf16.mxu0 0
      %875 = vmatpush1.bf16.msra.mxu0 0
      %876 = vmatprep.subr.bf16.mxu0 0
      %877 = vmatpush1.bf16.msra.mxu0 0
      %878 = vmatprep.subr.bf16.mxu0 0
      %879 = vmatpush1.bf16.msra.mxu0 0
      %880 = vmatprep.subr.bf16.mxu0 0
      %881 = vmatpush1.bf16.msra.mxu0 0
      %882 = vmatprep.subr.bf16.mxu0 0
      %883 = vmatpush1.bf16.msra.mxu0 0
      %884 = vmatprep.subr.bf16.mxu0 0
      %885 = vmatpush1.bf16.msra.mxu0 0
      %886 = vmatprep.subr.bf16.mxu0 0
      %887 = vmatpush1.bf16.msra.mxu0 0
      %888 = vmatprep.subr.bf16.mxu0 0
      %889 = vmatpush1.bf16.msra.mxu0 0
      %890 = vmatprep.subr.bf16.mxu0 0
      %891 = vmatpush1.bf16.msra.mxu0 0
      %892 = vmatprep.subr.bf16.mxu0 0
      %893 = vmatpush1.bf16.msra.mxu0 0
      %894 = vmatprep.subr.bf16.mxu0 0
      %895 = vmatpush1.bf16.msra.mxu0 0
      %896 = vmatprep.subr.bf16.mxu0 0
      %897 = vmatpush1.bf16.msra.mxu0 0
      %898 = vmatprep.subr.bf16.mxu0 0
      %899 = vmatpush1.bf16.msra.mxu0 0
      %900 = vmatprep.subr.bf16.mxu0 0
      %901 = vmatpush1.bf16.msra.mxu0 0
      %902 = vmatprep.mubr.bf16.mxu0 0
      %903 = vmatmul.mubr.bf16.gmra.mrb[0].mxu0 %v864
      %v904 = vpop.f32.mrb[0].mxu0
      %v905 = vadd.f32 %v855, %v904
      %v906 = vpop.f32.mrb[0].mxu0
      %v907 = vpop.f32.mrb[0].mxu0
      %v908 = vadd.f32 %v855, %v907
      %v909 = vpop.f32.mrb[0].mxu0
      %910 = vdwg.mxu0
      %v911 = vmax.f32 %v905, 0.0
      %v912 = vmax.f32 %v908, 0.0
      %v913 = vld [vmem:[#allocation2] sm:$0xff]
      %v914 = vld [vmem:[#allocation2 + $0x8] sm:$0xff]
      %v915 = vld [vmem:[%s5] sm:$0x1]
      %v917 = vlaneseq
      %v918 = vshrl.u32 %v917, 7
      %v919 = vsub.s32 0, %v918
      %v920 = vrot.slane %v915, %v919
      %v922 = vadd.f32 %v913, %v920
      %v923 = vadd.f32 %v914, %v920
      %v924 = vmax.f32 %v922, 0.0
      %v925 = vmax.f32 %v923, 0.0
      %v926 = vpack.c.bf16 %v912, %v911
      %v927 = vld [vmem:[#allocation8] sm:$0xf]
      %v928 = vld [vmem:[#allocation8 + $0x4] sm:$0xf]
      %v929 = vld [vmem:[#allocation8 + $0x8] sm:$0xf]
      %v930 = vld [vmem:[#allocation8 + $0xc] sm:$0xf]
      %v931 = vld [vmem:[#allocation8 + $0x10] sm:$0xf]
      %v932 = vld [vmem:[#allocation8 + $0x14] sm:$0xf]
      %v933 = vld [vmem:[#allocation8 + $0x18] sm:$0xf]
      %v934 = vld [vmem:[#allocation8 + $0x1c] sm:$0xf]
      %v935 = vld [vmem:[#allocation8 + $0x20] sm:$0xf]
      %v936 = vld [vmem:[#allocation8 + $0x24] sm:$0xf]
      %v937 = vld [vmem:[#allocation8 + $0x28] sm:$0xf]
      %v938 = vld [vmem:[#allocation8 + $0x2c] sm:$0xf]
      %v939 = vld [vmem:[#allocation8 + $0x30] sm:$0xf]
      %v940 = vld [vmem:[#allocation8 + $0x34] sm:$0xf]
      %v941 = vld [vmem:[#allocation8 + $0x38] sm:$0xf]
      %v942 = vld [vmem:[#allocation8 + $0x3c] sm:$0xf]
      %v943 = vpack.c.bf16 %v925, %v924
      %v944 = vld [vmem:[#allocation9] sm:$0xf]
      %v945 = vld [vmem:[#allocation9 + $0x4] sm:$0xf]
      %v946 = vld [vmem:[#allocation9 + $0x8] sm:$0xf]
      %v947 = vld [vmem:[#allocation9 + $0xc] sm:$0xf]
      %v948 = vld [vmem:[#allocation9 + $0x10] sm:$0xf]
      %v949 = vld [vmem:[#allocation9 + $0x14] sm:$0xf]
      %v950 = vld [vmem:[#allocation9 + $0x18] sm:$0xf]
      %v951 = vld [vmem:[#allocation9 + $0x1c] sm:$0xf]
      %v952 = vld [vmem:[#allocation9 + $0x20] sm:$0xf]
      %v953 = vld [vmem:[#allocation9 + $0x24] sm:$0xf]
      %v954 = vld [vmem:[#allocation9 + $0x28] sm:$0xf]
      %v955 = vld [vmem:[#allocation9 + $0x2c] sm:$0xf]
      %v956 = vld [vmem:[#allocation9 + $0x30] sm:$0xf]
      %v957 = vld [vmem:[#allocation9 + $0x34] sm:$0xf]
      %v958 = vld [vmem:[#allocation9 + $0x38] sm:$0xf]
      %v959 = vld [vmem:[#allocation9 + $0x3c] sm:$0xf]
      %v976 = vunpack.c.l.b16 %v944
      %v977 = vunpack.c.l.b16 %v945
      %v978 = vunpack.c.l.b16 %v946
      %v979 = vunpack.c.l.b16 %v947
      %v980 = vunpack.c.l.b16 %v948
      %v981 = vunpack.c.l.b16 %v949
      %v982 = vunpack.c.l.b16 %v950
      %v983 = vunpack.c.l.b16 %v951
      %v984 = vunpack.c.l.b16 %v952
      %v985 = vunpack.c.l.b16 %v953
      %v986 = vunpack.c.l.b16 %v954
      %v987 = vunpack.c.l.b16 %v955
      %v988 = vunpack.c.l.b16 %v956
      %v989 = vunpack.c.l.b16 %v957
      %v990 = vunpack.c.l.b16 %v958
      %v991 = vunpack.c.l.b16 %v959
      %v992 = vpack.c.b16 %v977, %v976
      %v993 = vpack.c.b16 %v979, %v978
      %v994 = vpack.c.b16 %v981, %v980
      %v995 = vpack.c.b16 %v983, %v982
      %v996 = vpack.c.b16 %v985, %v984
      %v997 = vpack.c.b16 %v987, %v986
      %v998 = vpack.c.b16 %v989, %v988
      %v999 = vpack.c.b16 %v991, %v990
      %1008 = vmatprep.subr.bf16.mxu0 0
      %1009 = vmatpush1.bf16.msra.mxu0 %v992
      %1010 = vmatprep.subr.bf16.mxu0 0
      %1011 = vmatpush1.bf16.msra.mxu0 %v993
      %1012 = vmatprep.subr.bf16.mxu0 0
      %1013 = vmatpush1.bf16.msra.mxu0 %v994
      %1014 = vmatprep.subr.bf16.mxu0 0
      %1015 = vmatpush1.bf16.msra.mxu0 %v995
      %1016 = vmatprep.subr.bf16.mxu0 0
      %1017 = vmatpush1.bf16.msra.mxu0 %v996
      %1018 = vmatprep.subr.bf16.mxu0 0
      %1019 = vmatpush1.bf16.msra.mxu0 %v997
      %1020 = vmatprep.subr.bf16.mxu0 0
      %1021 = vmatpush1.bf16.msra.mxu0 %v998
      %1022 = vmatprep.subr.bf16.mxu0 0
      %1023 = vmatpush1.bf16.msra.mxu0 %v999
      %1024 = vmatprep.subr.bf16.mxu0 0
      %1025 = vmatpush1.bf16.msra.mxu0 0
      %1026 = vmatprep.subr.bf16.mxu0 0
      %1027 = vmatpush1.bf16.msra.mxu0 0
      %1028 = vmatprep.subr.bf16.mxu0 0
      %1029 = vmatpush1.bf16.msra.mxu0 0
      %1030 = vmatprep.subr.bf16.mxu0 0
      %1031 = vmatpush1.bf16.msra.mxu0 0
      %1032 = vmatprep.subr.bf16.mxu0 0
      %1033 = vmatpush1.bf16.msra.mxu0 0
      %1034 = vmatprep.subr.bf16.mxu0 0
      %1035 = vmatpush1.bf16.msra.mxu0 0
      %1036 = vmatprep.subr.bf16.mxu0 0
      %1037 = vmatpush1.bf16.msra.mxu0 0
      %1038 = vmatprep.subr.bf16.mxu0 0
      %1039 = vmatpush1.bf16.msra.mxu0 0
      %1040 = vmatprep.mubr.bf16.mxu0 0
      %1041 = vmatmul.mubr.bf16.gmra.mrb[0].mxu0 %v943
      %v1042 = vpop.f32.mrb[0].mxu0
      %v1043 = vadd.f32 0.0, %v1042
      %v1044 = vpop.f32.mrb[0].mxu0
      %v1045 = vpop.f32.mrb[0].mxu0
      %v1046 = vadd.f32 0.0, %v1045
      %v1047 = vpop.f32.mrb[0].mxu0
      %1048 = vdwg.mxu0
      %v1065 = vunpack.c.l.b16 %v927
      %v1066 = vunpack.c.l.b16 %v928
      %v1067 = vunpack.c.l.b16 %v929
      %v1068 = vunpack.c.l.b16 %v930
      %v1069 = vunpack.c.l.b16 %v931
      %v1070 = vunpack.c.l.b16 %v932
      %v1071 = vunpack.c.l.b16 %v933
      %v1072 = vunpack.c.l.b16 %v934
      %v1073 = vunpack.c.l.b16 %v935
      %v1074 = vunpack.c.l.b16 %v936
      %v1075 = vunpack.c.l.b16 %v937
      %v1076 = vunpack.c.l.b16 %v938
      %v1077 = vunpack.c.l.b16 %v939
      %v1078 = vunpack.c.l.b16 %v940
      %v1079 = vunpack.c.l.b16 %v941
      %v1080 = vunpack.c.l.b16 %v942
      %v1081 = vpack.c.b16 %v1066, %v1065
      %v1082 = vpack.c.b16 %v1068, %v1067
      %v1083 = vpack.c.b16 %v1070, %v1069
      %v1084 = vpack.c.b16 %v1072, %v1071
      %v1085 = vpack.c.b16 %v1074, %v1073
      %v1086 = vpack.c.b16 %v1076, %v1075
      %v1087 = vpack.c.b16 %v1078, %v1077
      %v1088 = vpack.c.b16 %v1080, %v1079
      %1097 = vmatprep.subr.bf16.mxu0 0
      %1098 = vmatpush1.bf16.msra.mxu0 %v1081
      %1099 = vmatprep.subr.bf16.mxu0 0
      %1100 = vmatpush1.bf16.msra.mxu0 %v1082
      %1101 = vmatprep.subr.bf16.mxu0 0
      %1102 = vmatpush1.bf16.msra.mxu0 %v1083
      %1103 = vmatprep.subr.bf16.mxu0 0
      %1104 = vmatpush1.bf16.msra.mxu0 %v1084
      %1105 = vmatprep.subr.bf16.mxu0 0
      %1106 = vmatpush1.bf16.msra.mxu0 %v1085
      %1107 = vmatprep.subr.bf16.mxu0 0
      %1108 = vmatpush1.bf16.msra.mxu0 %v1086
      %1109 = vmatprep.subr.bf16.mxu0 0
      %1110 = vmatpush1.bf16.msra.mxu0 %v1087
      %1111 = vmatprep.subr.bf16.mxu0 0
      %1112 = vmatpush1.bf16.msra.mxu0 %v1088
      %1113 = vmatprep.subr.bf16.mxu0 0
      %1114 = vmatpush1.bf16.msra.mxu0 0
      %1115 = vmatprep.subr.bf16.mxu0 0
      %1116 = vmatpush1.bf16.msra.mxu0 0
      %1117 = vmatprep.subr.bf16.mxu0 0
      %1118 = vmatpush1.bf16.msra.mxu0 0
      %1119 = vmatprep.subr.bf16.mxu0 0
      %1120 = vmatpush1.bf16.msra.mxu0 0
      %1121 = vmatprep.subr.bf16.mxu0 0
      %1122 = vmatpush1.bf16.msra.mxu0 0
      %1123 = vmatprep.subr.bf16.mxu0 0
      %1124 = vmatpush1.bf16.msra.mxu0 0
      %1125 = vmatprep.subr.bf16.mxu0 0
      %1126 = vmatpush1.bf16.msra.mxu0 0
      %1127 = vmatprep.subr.bf16.mxu0 0
      %1128 = vmatpush1.bf16.msra.mxu0 0
      %1129 = vmatprep.mubr.bf16.mxu0 0
      %1130 = vmatmul.mubr.bf16.gmra.mrb[0].mxu0 %v926
      %v1131 = vpop.f32.mrb[0].mxu0
      %v1132 = vadd.f32 %v1043, %v1131
      %v1133 = vpop.f32.mrb[0].mxu0
      %v1134 = vpop.f32.mrb[0].mxu0
      %v1135 = vadd.f32 %v1046, %v1134
      %v1136 = vpop.f32.mrb[0].mxu0
      %1137 = vdwg.mxu0
      %v1138 = vld [vmem:[%s8] sm:$0x1]
      %v1140 = vlaneseq
      %v1141 = vshrl.u32 %v1140, 7
      %v1142 = vsub.s32 0, %v1141
      %v1143 = vrot.slane %v1138, %v1142
      %v1145 = vadd.f32 %v1132, %v1143
      %v1146 = vadd.f32 %v1135, %v1143
      %v1147 = vmax.f32 %v1145, 0.0
      %v1148 = vmax.f32 %v1146, 0.0
      %v1149 = vpack.c.bf16 %v1148, %v1147
      %v1150 = vld [vmem:[#allocation11] sm:$0xf]
      %v1151 = vld [vmem:[#allocation11 + $0x4] sm:$0xf]
      %v1152 = vld [vmem:[#allocation11 + $0x8] sm:$0xf]
      %v1153 = vld [vmem:[#allocation11 + $0xc] sm:$0xf]
      %v1154 = vld [vmem:[#allocation11 + $0x10] sm:$0xf]
      %v1155 = vld [vmem:[#allocation11 + $0x14] sm:$0xf]
      %v1156 = vld [vmem:[#allocation11 + $0x18] sm:$0xf]
      %v1157 = vld [vmem:[#allocation11 + $0x1c] sm:$0xf]
      %v1158 = vld [vmem:[#allocation11 + $0x20] sm:$0xf]
      %v1159 = vld [vmem:[#allocation11 + $0x24] sm:$0xf]
      %v1160 = vld [vmem:[#allocation11 + $0x28] sm:$0xf]
      %v1161 = vld [vmem:[#allocation11 + $0x2c] sm:$0xf]
      %v1162 = vld [vmem:[#allocation11 + $0x30] sm:$0xf]
      %v1163 = vld [vmem:[#allocation11 + $0x34] sm:$0xf]
      %v1164 = vld [vmem:[#allocation11 + $0x38] sm:$0xf]
      %v1165 = vld [vmem:[#allocation11 + $0x3c] sm:$0xf]
      %v1166 = vld [vmem:[%s10] sm:$0x1]
      %v1168 = vlaneseq
      %v1169 = vshrl.u32 %v1168, 7
      %v1170 = vsub.s32 0, %v1169
      %v1171 = vrot.slane %v1166, %v1170
      %v1189 = vunpack.c.l.b16 %v1150
      %v1190 = vunpack.c.l.b16 %v1151
      %v1191 = vunpack.c.l.b16 %v1152
      %v1192 = vunpack.c.l.b16 %v1153
      %v1193 = vunpack.c.l.b16 %v1154
      %v1194 = vunpack.c.l.b16 %v1155
      %v1195 = vunpack.c.l.b16 %v1156
      %v1196 = vunpack.c.l.b16 %v1157
      %v1197 = vunpack.c.l.b16 %v1158
      %v1198 = vunpack.c.l.b16 %v1159
      %v1199 = vunpack.c.l.b16 %v1160
      %v1200 = vunpack.c.l.b16 %v1161
      %v1201 = vunpack.c.l.b16 %v1162
      %v1202 = vunpack.c.l.b16 %v1163
      %v1203 = vunpack.c.l.b16 %v1164
      %v1204 = vunpack.c.l.b16 %v1165
      %v1205 = vpack.c.b16 %v1190, %v1189
      %v1206 = vpack.c.b16 %v1192, %v1191
      %v1207 = vpack.c.b16 %v1194, %v1193
      %v1208 = vpack.c.b16 %v1196, %v1195
      %v1209 = vpack.c.b16 %v1198, %v1197
      %v1210 = vpack.c.b16 %v1200, %v1199
      %v1211 = vpack.c.b16 %v1202, %v1201
      %v1212 = vpack.c.b16 %v1204, %v1203
      %1221 = vmatprep.subr.bf16.mxu0 0
      %1222 = vmatpush1.bf16.msra.mxu0 %v1205
      %1223 = vmatprep.subr.bf16.mxu0 0
      %1224 = vmatpush1.bf16.msra.mxu0 %v1206
      %1225 = vmatprep.subr.bf16.mxu0 0
      %1226 = vmatpush1.bf16.msra.mxu0 %v1207
      %1227 = vmatprep.subr.bf16.mxu0 0
      %1228 = vmatpush1.bf16.msra.mxu0 %v1208
      %1229 = vmatprep.subr.bf16.mxu0 0
      %1230 = vmatpush1.bf16.msra.mxu0 %v1209
      %1231 = vmatprep.subr.bf16.mxu0 0
      %1232 = vmatpush1.bf16.msra.mxu0 %v1210
      %1233 = vmatprep.subr.bf16.mxu0 0
      %1234 = vmatpush1.bf16.msra.mxu0 %v1211
      %1235 = vmatprep.subr.bf16.mxu0 0
      %1236 = vmatpush1.bf16.msra.mxu0 %v1212
      %1237 = vmatprep.subr.bf16.mxu0 0
      %1238 = vmatpush1.bf16.msra.mxu0 0
      %1239 = vmatprep.subr.bf16.mxu0 0
      %1240 = vmatpush1.bf16.msra.mxu0 0
      %1241 = vmatprep.subr.bf16.mxu0 0
      %1242 = vmatpush1.bf16.msra.mxu0 0
      %1243 = vmatprep.subr.bf16.mxu0 0
      %1244 = vmatpush1.bf16.msra.mxu0 0
      %1245 = vmatprep.subr.bf16.mxu0 0
      %1246 = vmatpush1.bf16.msra.mxu0 0
      %1247 = vmatprep.subr.bf16.mxu0 0
      %1248 = vmatpush1.bf16.msra.mxu0 0
      %1249 = vmatprep.subr.bf16.mxu0 0
      %1250 = vmatpush1.bf16.msra.mxu0 0
      %1251 = vmatprep.subr.bf16.mxu0 0
      %1252 = vmatpush1.bf16.msra.mxu0 0
      %1253 = vmatprep.mubr.bf16.mxu0 0
      %1254 = vmatmul.mubr.bf16.gmra.mrb[0].mxu0 %v1149
      %v1255 = vpop.f32.mrb[0].mxu0
      %v1256 = vadd.f32 %v1171, %v1255
      %v1257 = vpop.f32.mrb[0].mxu0
      %v1258 = vpop.f32.mrb[0].mxu0
      %v1259 = vadd.f32 %v1171, %v1258
      %v1260 = vpop.f32.mrb[0].mxu0
      %1261 = vdwg.mxu0
      %v1262 = vlaneseq
      %v1263 = vand.u32 %v1262, 127
      %vm1264 = vcmp.lt.s32.totalorder %v1263, 2
      %v1265 = vsel %vm1264, %v1256, -1e+30
      %v1266 = vsel %vm1264, %v1259, -1e+30
      %1267 = vmax.xlane.f32.xlu0 %v1265
      %v1268 = vpop.xlane.xlu0 %1267
      %1269 = vmax.xlane.f32.xlu0 %v1266
      %v1270 = vpop.xlane.xlu0 %1269
      %v1271 = vsub.f32 %v1265, %v1268
      %v1272 = vsub.f32 %v1266, %v1270
      %v1273 = vmul.f32 %v1271, 1.442695
      %v1274 = vpow.pop %v1273
      %v1275 = vmul.f32 %v1272, 1.442695
      %v1276 = vpow.pop %v1275
      %1277 = vadd.xlane.f32.xlu0 %v1274
      %v1278 = vpop.xlane.xlu0 %1277
      %1279 = vadd.xlane.f32.xlu0 %v1276
      %v1280 = vpop.xlane.xlu0 %1279
      %v1281 = vrcp.pop %v1278
      %v1282 = vrcp.pop %v1280
      %v1283 = vmul.f32 %v1274, %v1281
      %v1284 = vmul.f32 %v1276, %v1282
      %1285 = vst [vmem:[#allocation12] sm:$0xff] %v1283
      %1286 = vst [vmem:[#allocation12 + $0x8] sm:$0xff] %v1284
    $region73: #{tpu_custom_call.1} parent=1 // pred_fallthru
      _
    // Predicated region
    $region74: #{tpu_custom_call.1} parent=1 // pred_check
      _
    $region75: #{tpu_custom_call.1} parent=1 // pred_check_branch
      %1288 = sbr.rel (0) target = $region77
    $region76: #{tpu_custom_call.1} parent=1 // pred_region
      %s1290 = ssub.s32 256, 256
      %1291 = vsyncadd [#allocation5], %s1290
      %s1292 = sshll.u32 [#allocation12], 4
      %s1293 = int_to_ptr.vmem [resolvable:$true] %s1292
      %1298 = dma.vmem_to_hbm [thread:$0]  %s1293, 256, %s11, [#allocation5], 128, 128, 8
    $region77: #{tpu_custom_call.1} parent=1 // pred_fallthru
      _
    // Predicated region
    $region78: #{tpu_custom_call.1} parent=1 // pred_check
      _
    $region79: #{tpu_custom_call.1} parent=1 // pred_check_branch
      %1300 = sbr.rel (0) target = $region81
    $region80: #{tpu_custom_call.1} parent=1 // pred_region
      %1301 = dma.done [#allocation5], 256
    $region81: #{tpu_custom_call.1} parent=1 // pred_fallthru
      _
    %1302 = vsyncpa [#allocation4], 1
    %1303 = vsyncpa [#allocation7], 1
    %1304 = vsyncpa [#allocation10], 1
    %1305 = vsyncpa [#allocation5], 1

</llo_original>
